<compile_context>
chip_gen: v6e
topology: v6e:2x2x1
jax: 0.10.0
libtpu: 0.0.40
codegen_flags: <defaults>
</compile_context>

<pallas_src>
import jax
import jax.numpy as jnp
import numpy as np
from jax import lax
from jax.experimental import pallas as pl
from jax.experimental.pallas import tpu as pltpu


def _round_up(n, m):
    return ((n + m - 1) // m) * m


def _tpu_generation():
    try:
        kind = jax.devices()[0].device_kind.lower()
    except Exception:
        return None
    if "v5" in kind:
        return "v5"
    if "v6" in kind:
        return "v6"
    if "v7" in kind or "7x" in kind:
        return "v7"
    return None


def _make_kernel(ti, e_pad, e_out, s_real, s_pad, exp_dtype, approx_recip):
    def kernel(x_ref, wqkv_ref, bqkv_ref, o_ref, qkv_ref):
        # x_ref:    (b_blk, S_pad, E_pad)  caller dtype, resident per batch block
        # wqkv_ref: (E_pad, 3*E_pad)       [K*1/sqrt(E) | Q | V]
        # bqkv_ref: (1, 3*E_pad)
        # o_ref:    (b_blk, Ti, E)         true-E output block
        # qkv_ref:  (b_blk, S_pad, 3*E_pad) persistent scratch (caller dtype)
        bb = x_ref.shape[0]
        dtype = x_ref.dtype
        t = pl.program_id(1)

        # ---- fused K/Q/V projection: once per batch block -----------------
        @pl.when(t == 0)
        def _project():
            x2 = x_ref[...].reshape(bb * s_pad, e_pad)
            qkv = lax.dot_general(x2, wqkv_ref[...], (((1,), (0,)), ((), ())),
                                  preferred_element_type=jnp.float32)
            qkv = qkv + bqkv_ref[...]
            qkv_ref[...] = qkv.astype(dtype).reshape(bb, s_pad, 3 * e_pad)

        row0 = pl.multiple_of(t * ti, ti)
        k_tile = qkv_ref[:, pl.ds(row0, ti), 0:e_pad]        # scaled keys tile
        q_all = qkv_ref[:, :, e_pad:2 * e_pad]
        v_all = qkv_ref[:, :, 2 * e_pad:3 * e_pad]

        # scores[b, i, j] = keys[b, i, :] . queries[b, j, :]   == bmm(K, Q^T)
        s = lax.dot_general(k_tile, q_all, (((2,), (2,)), ((0,), (0,))),
                            preferred_element_type=jnp.float32)   # (bb, Ti, S_pad)

        if s_pad != s_real:
            # Padded query columns would carry bias-only junk: mask them out of
            # the softmax so real rows are unaffected.
            col = lax.broadcasted_iota(jnp.int32, s.shape, 2)
            s = jnp.where(col < s_real, s, jnp.float32(-1e30))

        # softmax over dim=2 (the module's query axis); max/sum/recip in f32.
        s = s - jnp.max(s, axis=-1, keepdims=True)
        p = jnp.exp(s.astype(exp_dtype))
        denom = jnp.sum(p.astype(jnp.float32), axis=-1, keepdims=True)
        inv = pl.reciprocal(denom, approx=approx_recip)
        p = (p * inv.astype(p.dtype)).astype(dtype)

        # out[b, i, :] = sum_j p[b, i, j] * values[b, j, :]     == bmm(p, V)
        out = lax.dot_general(p, v_all, (((2,), (1,)), ((0,), (0,))),
                              preferred_element_type=jnp.float32)
        o_ref[...] = out[:, :, :e_out].astype(o_ref.dtype)

    return kernel


def self_attention(x, wq, wk, wv, bq, bk, bv, *, vmem_budget_bytes=None):
    """x: (B, S, E); wq/wk/wv: (E, E) PyTorch (out, in) layout; b*: (E,)."""
    B, S, E = x.shape
    dtype = x.dtype
    itemsize = jnp.dtype(dtype).itemsize
    E_pad = _round_up(E, 128)

    gen = _tpu_generation()
    older = gen in ("v5", "v6")                    # 128 MiB-VMEM generations
    if vmem_budget_bytes is None:                  # generation-aware defaults
        vmem_budget_bytes = (40 << 20) if older else (20 << 20)
    vmem_cap = (110 << 20) if older else (52 << 20)
    base_limit = (64 << 20) if older else (40 << 20)
    mxu_tile = 128 if gen == "v5" else 256
    sub = max(8, 32 // itemsize)                   # sublane pack: 8 f32, 16 bf16

    # ---- tile / batch-block selection against an honest VMEM model --------
    def vmem_estimate(b_blk, ti, single_buf_w):
        s_p = _round_up(S, ti)
        exp_isz = 2 if (dtype == jnp.bfloat16 and gen != "v5") else 4
        w_bufs = 1 if single_buf_w else 2
        est = 0
        est += 2 * b_blk * s_p * E_pad * itemsize              # x block (dbl-buf)
        est += 2 * b_blk * ti * E * itemsize                   # out block (dbl-buf)
        est += w_bufs * (E_pad * 3 * E_pad + 3 * E_pad) * itemsize   # fused W + b
        est += b_blk * s_p * 3 * E_pad * itemsize              # persistent QKV scratch
        est += b_blk * s_p * 3 * E_pad * 4                     # f32 projection interm.
        est += b_blk * ti * s_p * 4                            # f32 scores
        est += b_blk * ti * s_p * (exp_isz + 4)                # p + f32 copy for sum
        est += b_blk * ti * E_pad * 4                          # f32 PV accumulator
        return est

    Ti = mxu_tile if S > mxu_tile else _round_up(S, sub)
    while Ti > sub and vmem_estimate(1, Ti, True) > vmem_budget_bytes:
        Ti = max(sub, _round_up(Ti // 2, sub))
    # TODO(synk): if even (b_blk=1, Ti=sub) overflows (huge E * long S), route
    # to a flash/KV-tiled path; here we just raise the scoped limit and go.

    max_b = max(1, B // 2) if B >= 2 else 1        # >=2 parallel steps (v7x megacore)
    b_blk = 1
    for d in range(max_b, 0, -1):
        if B % d == 0 and vmem_estimate(d, Ti, True) <= vmem_budget_bytes:
            b_blk = d
            break

    S_pad = _round_up(S, Ti)
    vmem_limit = int(min(vmem_cap,
                         max(base_limit, 1.25 * vmem_estimate(b_blk, Ti, False))))

    # ---- wrapper-side parameter prep (pure glue) ---------------------------
    # PyTorch Linear: y = x @ W.T + b  -> transpose to (in, out).  Fold the
    # 1/sqrt(E) score scale into the K projection (weight AND bias) and pack
    # [K | Q | V] lane-aligned into one fused (E_pad, 3*E_pad) weight.
    scale = 1.0 / float(np.sqrt(E))
    wqkv = jnp.zeros((E_pad, 3 * E_pad), dtype)
    wqkv = wqkv.at[:E, 0 * E_pad:0 * E_pad + E].set((wk.T * scale).astype(dtype))
    wqkv = wqkv.at[:E, 1 * E_pad:1 * E_pad + E].set(wq.T.astype(dtype))
    wqkv = wqkv.at[:E, 2 * E_pad:2 * E_pad + E].set(wv.T.astype(dtype))

    bqkv = jnp.zeros((1, 3 * E_pad), dtype)
    bqkv = bqkv.at[0, 0 * E_pad:0 * E_pad + E].set((bk * scale).astype(dtype))
    bqkv = bqkv.at[0, 1 * E_pad:1 * E_pad + E].set(bq.astype(dtype))
    bqkv = bqkv.at[0, 2 * E_pad:2 * E_pad + E].set(bv.astype(dtype))

    pad_s, pad_e = S_pad - S, E_pad - E
    x_in = x if (pad_s == 0 and pad_e == 0) else jnp.pad(
        x, ((0, 0), (0, pad_s), (0, pad_e)))

    exp_dtype = (jnp.bfloat16 if (dtype == jnp.bfloat16 and gen != "v5")
                 else jnp.float32)
    approx_recip = bool(dtype == jnp.bfloat16)     # exact 1/x on the f32 path
    kernel = _make_kernel(Ti, E_pad, E, S, S_pad, exp_dtype, approx_recip)

    grid = (B // b_blk, S_pad // Ti)

    def _run(single_buffer_weights):
        wkw = ({"pipeline_mode": pl.Buffered(1)} if single_buffer_weights else {})
        return pl.pallas_call(
            kernel,
            out_shape=jax.ShapeDtypeStruct((B, S_pad, E), dtype),
            grid_spec=pltpu.PrefetchScalarGridSpec(
                num_scalar_prefetch=0,
                grid=grid,
                in_specs=[
                    pl.BlockSpec((b_blk, S_pad, E_pad), lambda b, t: (b, 0, 0)),
                    pl.BlockSpec((E_pad, 3 * E_pad), lambda b, t: (0, 0), **wkw),
                    pl.BlockSpec((1, 3 * E_pad), lambda b, t: (0, 0), **wkw),
                ],
                out_specs=pl.BlockSpec((b_blk, Ti, E), lambda b, t: (b, t, 0)),
                scratch_shapes=[pltpu.VMEM((b_blk, S_pad, 3 * E_pad), dtype)],
            ),
            compiler_params=pltpu.CompilerParams(
                dimension_semantics=("parallel", "arbitrary"),
                vmem_limit_bytes=vmem_limit),
        )(x_in, wqkv, bqkv)

    try:
        out = _run(True)       # weights single-buffered (constant index_map)
    except Exception:          # fallback for jax builds without pipeline_mode
        out = _run(False)

    return out if S_pad == S else out[:, :S, :]


def self_attention_ref(x, wq, wk, wv, bq, bk, bv):
    """Plain-JAX reference mirroring the PyTorch module exactly."""
    E = x.shape[-1]
    keys = jnp.einsum("bne,oe->bno", x, wk) + bk
    queries = jnp.einsum("bne,oe->bno", x, wq) + bq
    values = jnp.einsum("bne,oe->bno", x, wv) + bv
    w = jnp.einsum("bie,bje->bij", keys, queries) / jnp.sqrt(jnp.float32(E))
    p = jax.nn.softmax(w, axis=-1)
    return jnp.einsum("bij,bje->bie", p, values)


if __name__ == "__main__":
    B, S, E = 2, 8, 32  # batch, seq_len, embedding_len (matches the module)

    key = jax.random.PRNGKey(0)
    kx, kq, kk, kv, kbq, kbk, kbv = jax.random.split(key, 7)

    x = jax.random.normal(kx, (B, S, E), dtype=jnp.float32)
    bound = 1.0 / float(np.sqrt(E))
    wq = jax.random.uniform(kq, (E, E), jnp.float32, -bound, bound)
    wk = jax.random.uniform(kk, (E, E), jnp.float32, -bound, bound)
    wv = jax.random.uniform(kv, (E, E), jnp.float32, -bound, bound)
    bq = jax.random.uniform(kbq, (E,), jnp.float32, -bound, bound)
    bk = jax.random.uniform(kbk, (E,), jnp.float32, -bound, bound)
    bv = jax.random.uniform(kbv, (E,), jnp.float32, -bound, bound)

    # f32 path (exact reciprocal, f32 exp).
    out = jax.block_until_ready(self_attention(x, wq, wk, wv, bq, bk, bv))
    ref = self_attention_ref(x, wq, wk, wv, bq, bk, bv)
    np.testing.assert_allclose(np.asarray(out), np.asarray(ref),
                               rtol=5e-3, atol=5e-3)

    # bf16 path (MXU-native dtype; exercises S padding + masking + bf16 exp).
    out_bf16 = jax.block_until_ready(
        self_attention(x.astype(jnp.bfloat16), wq.astype(jnp.bfloat16),
                       wk.astype(jnp.bfloat16), wv.astype(jnp.bfloat16),
                       bq.astype(jnp.bfloat16), bk.astype(jnp.bfloat16),
                       bv.astype(jnp.bfloat16)))
    np.testing.assert_allclose(np.asarray(out_bf16).astype(np.float32),
                               np.asarray(ref), rtol=7e-2, atol=7e-2)

    print("KERNEL_OK")
</pallas_src>

<mosaic_0001>
module attributes {stable_mosaic.version = 11 : i64} {
  func.func @kernel(%arg0: i32, %arg1: i32, %arg2: memref<1x8x128xf32, #tpu.memory_space<vmem>>, %arg3: memref<128x384xf32, #tpu.memory_space<vmem>>, %arg4: memref<1x384xf32, #tpu.memory_space<vmem>>, %arg5: memref<1x8x32xf32, #tpu.memory_space<vmem>>, %arg6: memref<1x8x384xf32, #tpu.memory_space<vmem>>) attributes {dimension_semantics = [#tpu.dimension_semantics<parallel>, #tpu.dimension_semantics<arbitrary>], iteration_bounds = array<i64: 2, 1>, scalar_prefetch = 0 : i64, scratch_operands = 1 : i64, tpu.core_type = #tpu.core_type<tc>, window_params = [{transform_indices = @transform_0, window_bounds = array<i64: 1, 8, 128>}, {pipeline_mode = #tpu.pipeline_mode<synchronous>, transform_indices = @transform_1, window_bounds = array<i64: 128, 384>}, {pipeline_mode = #tpu.pipeline_mode<synchronous>, transform_indices = @transform_2, window_bounds = array<i64: 1, 384>}, {transform_indices = @transform_3, window_bounds = array<i64: 1, 8, 32>}]} {
    %c0_i32 = arith.constant 0 : i32
    %0 = arith.cmpi eq, %arg1, %c0_i32 : i32
    %1 = arith.extui %0 : i1 to i32
    %c0_i32_0 = arith.constant 0 : i32
    %2 = arith.cmpi ne, %1, %c0_i32_0 : i32
    scf.if %2 {
      %c0_12 = arith.constant 0 : index
      %c0_13 = arith.constant 0 : index
      %c0_14 = arith.constant 0 : index
      %23 = vector.load %arg2[%c0_12, %c0_13, %c0_14] : memref<1x8x128xf32, #tpu.memory_space<vmem>>, vector<1x8x128xf32>
      %24 = vector.shape_cast %23 : vector<1x8x128xf32> to vector<8x128xf32>
      %c0_15 = arith.constant 0 : index
      %c0_16 = arith.constant 0 : index
      %25 = vector.load %arg3[%c0_15, %c0_16] : memref<128x384xf32, #tpu.memory_space<vmem>>, vector<128x384xf32>
      %cst_17 = arith.constant dense<0.000000e+00> : vector<8x384xf32>
      %26 = tpu.matmul %24, %25, %cst_17 {dimension_numbers = #tpu.dot_dimension_numbers<[1], [0], [0], [1], [0, 0, 1, 1], [], []>} : vector<8x128xf32>, vector<128x384xf32>, vector<8x384xf32> -> vector<8x384xf32>
      %c0_18 = arith.constant 0 : index
      %c0_19 = arith.constant 0 : index
      %27 = vector.load %arg4[%c0_18, %c0_19] : memref<1x384xf32, #tpu.memory_space<vmem>>, vector<1x384xf32>
      %28 = vector.broadcast %27 : vector<1x384xf32> to vector<8x384xf32>
      %29 = arith.addf %26, %28 : vector<8x384xf32>
      %30 = vector.shape_cast %29 : vector<8x384xf32> to vector<1x8x384xf32>
      %c0_20 = arith.constant 0 : index
      %c0_21 = arith.constant 0 : index
      %c0_22 = arith.constant 0 : index
      %31 = vector.load %arg6[%c0_20, %c0_21, %c0_22] : memref<1x8x384xf32, #tpu.memory_space<vmem>>, vector<1x8x384xf32>
      tpu.vector_store %arg6[%c0_20, %c0_21, %c0_22], %30 {strides = array<i32>} : memref<1x8x384xf32, #tpu.memory_space<vmem>>, vector<1x8x384xf32>,
    } else {
    }
    %c8_i32 = arith.constant 8 : i32
    %3 = arith.muli %arg1, %c8_i32 : i32
    %4 = tpu.assume_multiple %3, 8 : i32
    %c0 = arith.constant 0 : index
    %5 = arith.index_cast %4 : i32 to index
    %c0_1 = arith.constant 0 : index
    %6 = vector.load %arg6[%c0, %5, %c0_1] : memref<1x8x384xf32, #tpu.memory_space<vmem>>, vector<1x8x128xf32>
    %c0_2 = arith.constant 0 : index
    %c0_3 = arith.constant 0 : index
    %c128 = arith.constant 128 : index
    %7 = vector.load %arg6[%c0_2, %c0_3, %c128] : memref<1x8x384xf32, #tpu.memory_space<vmem>>, vector<1x8x128xf32>
    %c0_4 = arith.constant 0 : index
    %c0_5 = arith.constant 0 : index
    %c256 = arith.constant 256 : index
    %8 = vector.load %arg6[%c0_4, %c0_5, %c256] : memref<1x8x384xf32, #tpu.memory_space<vmem>>, vector<1x8x128xf32>
    %cst = arith.constant dense<0.000000e+00> : vector<1x8x8xf32>
    %9 = tpu.matmul %6, %7, %cst {dimension_numbers = #tpu.dot_dimension_numbers<[2], [2], [1], [1], [0, 0, 0, 1, 1, 1], [0], [0]>} : vector<1x8x128xf32>, vector<1x8x128xf32>, vector<1x8x8xf32> -> vector<1x8x8xf32>
    %cst_6 = arith.constant dense<0xFF800000> : vector<1x8xf32>
    %10 = vector.multi_reduction <maximumf>, %9, %cst_6 [2] : vector<1x8x8xf32> to vector<1x8xf32>
    %11 = vector.shape_cast %10 : vector<1x8xf32> to vector<1x8x1xf32>
    %12 = vector.broadcast %11 : vector<1x8x1xf32> to vector<1x8x8xf32>
    %13 = arith.subf %9, %12 : vector<1x8x8xf32>
    %14 = math.exp %13 : vector<1x8x8xf32>
    %cst_7 = arith.constant dense<0.000000e+00> : vector<1x8xf32>
    %15 = vector.multi_reduction <add>, %14, %cst_7 [2] : vector<1x8x8xf32> to vector<1x8xf32>
    %16 = vector.shape_cast %15 : vector<1x8xf32> to vector<1x8x1xf32>
    %17 = tpu.reciprocal %16 : vector<1x8x1xf32> -> vector<1x8x1xf32>
    %18 = vector.broadcast %17 : vector<1x8x1xf32> to vector<1x8x8xf32>
    %19 = arith.mulf %14, %18 : vector<1x8x8xf32>
    %cst_8 = arith.constant dense<0.000000e+00> : vector<1x8x128xf32>
    %20 = tpu.matmul %19, %8, %cst_8 {dimension_numbers = #tpu.dot_dimension_numbers<[2], [1], [1], [2], [0, 0, 0, 1, 1, 2], [0], [0]>} : vector<1x8x8xf32>, vector<1x8x128xf32>, vector<1x8x128xf32> -> vector<1x8x128xf32>
    %21 = vector.extract_strided_slice %20 {offsets = [0, 0, 0], sizes = [1, 8, 32], strides = [1, 1, 1]} : vector<1x8x128xf32> to vector<1x8x32xf32>
    %c0_9 = arith.constant 0 : index
    %c0_10 = arith.constant 0 : index
    %c0_11 = arith.constant 0 : index
    %22 = vector.load %arg5[%c0_9, %c0_10, %c0_11] : memref<1x8x32xf32, #tpu.memory_space<vmem>>, vector<1x8x32xf32>
    tpu.vector_store %arg5[%c0_9, %c0_10, %c0_11], %21 {strides = array<i32>} : memref<1x8x32xf32, #tpu.memory_space<vmem>>, vector<1x8x32xf32>,
    return
  }
  func.func @transform_0(%arg0: i32, %arg1: i32) -> (i32, i32, i32) {
    %c0_i32 = arith.constant 0 : i32
    %c0_i32_0 = arith.constant 0 : i32
    %c0_i32_1 = arith.constant 0 : i32
    return %arg0, %c0_i32, %c0_i32_0 : i32, i32, i32
  }
  func.func @transform_1(%arg0: i32, %arg1: i32) -> (i32, i32) {
    %c0_i32 = arith.constant 0 : i32
    %c0_i32_0 = arith.constant 0 : i32
    %c0_i32_1 = arith.constant 0 : i32
    return %c0_i32, %c0_i32_0 : i32, i32
  }
  func.func @transform_2(%arg0: i32, %arg1: i32) -> (i32, i32) {
    %c0_i32 = arith.constant 0 : i32
    %c0_i32_0 = arith.constant 0 : i32
    %c0_i32_1 = arith.constant 0 : i32
    return %c0_i32, %c0_i32_0 : i32, i32
  }
  func.func @transform_3(%arg0: i32, %arg1: i32) -> (i32, i32, i32) {
    %c0_i32 = arith.constant 0 : i32
    %c0_i32_0 = arith.constant 0 : i32
    return %arg0, %arg1, %c0_i32 : i32, i32, i32
  }
}

module attributes {stable_mosaic.version = 11 : i64} {
  func.func @kernel(%arg0: i32, %arg1: i32, %arg2: memref<1x8x128xf32, #tpu.memory_space<vmem>>, %arg3: memref<128x384xf32, #tpu.memory_space<vmem>>, %arg4: memref<1x384xf32, #tpu.memory_space<vmem>>, %arg5: memref<1x8x32xf32, #tpu.memory_space<vmem>>, %arg6: memref<1x8x384xf32, #tpu.memory_space<vmem>>) attributes {dimension_semantics = [#tpu.dimension_semantics<parallel>, #tpu.dimension_semantics<arbitrary>], iteration_bounds = array<i64: 2, 1>, scalar_prefetch = 0 : i64, scratch_operands = 1 : i64, tpu.core_type = #tpu.core_type<tc>, window_params = [{transform_indices = @transform_0, window_bounds = array<i64: 1, 8, 128>}, {pipeline_mode = #tpu.pipeline_mode<synchronous>, transform_indices = @transform_1, window_bounds = array<i64: 128, 384>}, {pipeline_mode = #tpu.pipeline_mode<synchronous>, transform_indices = @transform_2, window_bounds = array<i64: 1, 384>}, {transform_indices = @transform_3, window_bounds = array<i64: 1, 8, 32>}]} {
    %c0_i32 = arith.constant 0 : i32
    %0 = arith.cmpi eq, %arg1, %c0_i32 : i32
    %1 = arith.extui %0 : i1 to i32
    %c0_i32_0 = arith.constant 0 : i32
    %2 = arith.cmpi ne, %1, %c0_i32_0 : i32
    scf.if %2 {
      %c0_12 = arith.constant 0 : index
      %c0_13 = arith.constant 0 : index
      %c0_14 = arith.constant 0 : index
      %23 = vector.load %arg2[%c0_12, %c0_13, %c0_14] : memref<1x8x128xf32, #tpu.memory_space<vmem>>, vector<1x8x128xf32>
      %24 = vector.shape_cast %23 : vector<1x8x128xf32> to vector<8x128xf32>
      %c0_15 = arith.constant 0 : index
      %c0_16 = arith.constant 0 : index
      %25 = vector.load %arg3[%c0_15, %c0_16] : memref<128x384xf32, #tpu.memory_space<vmem>>, vector<128x384xf32>
      %cst_17 = arith.constant dense<0.000000e+00> : vector<8x384xf32>
      %26 = tpu.matmul %24, %25, %cst_17 {dimension_numbers = #tpu.dot_dimension_numbers<[1], [0], [0], [1], [0, 0, 1, 1], [], []>} : vector<8x128xf32>, vector<128x384xf32>, vector<8x384xf32> -> vector<8x384xf32>
      %c0_18 = arith.constant 0 : index
      %c0_19 = arith.constant 0 : index
      %27 = vector.load %arg4[%c0_18, %c0_19] : memref<1x384xf32, #tpu.memory_space<vmem>>, vector<1x384xf32>
      %28 = vector.broadcast %27 : vector<1x384xf32> to vector<8x384xf32>
      %29 = arith.addf %26, %28 : vector<8x384xf32>
      %30 = vector.shape_cast %29 : vector<8x384xf32> to vector<1x8x384xf32>
      %c0_20 = arith.constant 0 : index
      %c0_21 = arith.constant 0 : index
      %c0_22 = arith.constant 0 : index
      %31 = vector.load %arg6[%c0_20, %c0_21, %c0_22] : memref<1x8x384xf32, #tpu.memory_space<vmem>>, vector<1x8x384xf32>
      tpu.vector_store %arg6[%c0_20, %c0_21, %c0_22], %30 {strides = array<i32>} : memref<1x8x384xf32, #tpu.memory_space<vmem>>, vector<1x8x384xf32>,
    } else {
    }
    %c8_i32 = arith.constant 8 : i32
    %3 = arith.muli %arg1, %c8_i32 : i32
    %4 = tpu.assume_multiple %3, 8 : i32
    %c0 = arith.constant 0 : index
    %5 = arith.index_cast %4 : i32 to index
    %c0_1 = arith.constant 0 : index
    %6 = vector.load %arg6[%c0, %5, %c0_1] : memref<1x8x384xf32, #tpu.memory_space<vmem>>, vector<1x8x128xf32>
    %c0_2 = arith.constant 0 : index
    %c0_3 = arith.constant 0 : index
    %c128 = arith.constant 128 : index
    %7 = vector.load %arg6[%c0_2, %c0_3, %c128] : memref<1x8x384xf32, #tpu.memory_space<vmem>>, vector<1x8x128xf32>
    %c0_4 = arith.constant 0 : index
    %c0_5 = arith.constant 0 : index
    %c256 = arith.constant 256 : index
    %8 = vector.load %arg6[%c0_4, %c0_5, %c256] : memref<1x8x384xf32, #tpu.memory_space<vmem>>, vector<1x8x128xf32>
    %cst = arith.constant dense<0.000000e+00> : vector<1x8x8xf32>
    %9 = tpu.matmul %6, %7, %cst {dimension_numbers = #tpu.dot_dimension_numbers<[2], [2], [1], [1], [0, 0, 0, 1, 1, 1], [0], [0]>} : vector<1x8x128xf32>, vector<1x8x128xf32>, vector<1x8x8xf32> -> vector<1x8x8xf32>
    %cst_6 = arith.constant dense<0xFF800000> : vector<1x8xf32>
    %10 = vector.multi_reduction <maximumf>, %9, %cst_6 [2] : vector<1x8x8xf32> to vector<1x8xf32>
    %11 = vector.shape_cast %10 : vector<1x8xf32> to vector<1x8x1xf32>
    %12 = vector.broadcast %11 : vector<1x8x1xf32> to vector<1x8x8xf32>
    %13 = arith.subf %9, %12 : vector<1x8x8xf32>
    %14 = math.exp %13 : vector<1x8x8xf32>
    %cst_7 = arith.constant dense<0.000000e+00> : vector<1x8xf32>
    %15 = vector.multi_reduction <add>, %14, %cst_7 [2] : vector<1x8x8xf32> to vector<1x8xf32>
    %16 = vector.shape_cast %15 : vector<1x8xf32> to vector<1x8x1xf32>
    %17 = tpu.reciprocal %16 : vector<1x8x1xf32> -> vector<1x8x1xf32>
    %18 = vector.broadcast %17 : vector<1x8x1xf32> to vector<1x8x8xf32>
    %19 = arith.mulf %14, %18 : vector<1x8x8xf32>
    %cst_8 = arith.constant dense<0.000000e+00> : vector<1x8x128xf32>
    %20 = tpu.matmul %19, %8, %cst_8 {dimension_numbers = #tpu.dot_dimension_numbers<[2], [1], [1], [2], [0, 0, 0, 1, 1, 2], [0], [0]>} : vector<1x8x8xf32>, vector<1x8x128xf32>, vector<1x8x128xf32> -> vector<1x8x128xf32>
    %21 = vector.extract_strided_slice %20 {offsets = [0, 0, 0], sizes = [1, 8, 32], strides = [1, 1, 1]} : vector<1x8x128xf32> to vector<1x8x32xf32>
    %c0_9 = arith.constant 0 : index
    %c0_10 = arith.constant 0 : index
    %c0_11 = arith.constant 0 : index
    %22 = vector.load %arg5[%c0_9, %c0_10, %c0_11] : memref<1x8x32xf32, #tpu.memory_space<vmem>>, vector<1x8x32xf32>
    tpu.vector_store %arg5[%c0_9, %c0_10, %c0_11], %21 {strides = array<i32>} : memref<1x8x32xf32, #tpu.memory_space<vmem>>, vector<1x8x32xf32>,
    return
  }
  func.func @transform_0(%arg0: i32, %arg1: i32) -> (i32, i32, i32) {
    %c0_i32 = arith.constant 0 : i32
    %c0_i32_0 = arith.constant 0 : i32
    %c0_i32_1 = arith.constant 0 : i32
    return %arg0, %c0_i32, %c0_i32_0 : i32, i32, i32
  }
  func.func @transform_1(%arg0: i32, %arg1: i32) -> (i32, i32) {
    %c0_i32 = arith.constant 0 : i32
    %c0_i32_0 = arith.constant 0 : i32
    %c0_i32_1 = arith.constant 0 : i32
    return %c0_i32, %c0_i32_0 : i32, i32
  }
  func.func @transform_2(%arg0: i32, %arg1: i32) -> (i32, i32) {
    %c0_i32 = arith.constant 0 : i32
    %c0_i32_0 = arith.constant 0 : i32
    %c0_i32_1 = arith.constant 0 : i32
    return %c0_i32, %c0_i32_0 : i32, i32
  }
  func.func @transform_3(%arg0: i32, %arg1: i32) -> (i32, i32, i32) {
    %c0_i32 = arith.constant 0 : i32
    %c0_i32_0 = arith.constant 0 : i32
    return %arg0, %arg1, %c0_i32 : i32, i32, i32
  }
}

</mosaic_0001>

<llo_original>
// kernel: tpu_custom_call.1
$region0: #{tpu_custom_call.1}
  #allocation0 [shape = 'u32[]', space=smem, size = 0x4, offset = 0x4, fixed_abs, tag = 'smem constant byte address 0x4 - core index']
  #allocation1 [shape = 'u32[144,128]{1,0:T(1,128)}', space=vmem, size = 0x12000, scoped, tag = 'internal scratch']
  #allocation2 [shape = 'f32[1,8,384]{2,1,0:T(8,128)}', space=vmem, size = 0x3000, scoped, tag = 'scratch operand']
  %s0 = inlined_call_operand.hbm [shape: f32[2,8,128], index: 0, kind: input, shape index: {}]
  %s1 = inlined_call_operand.hbm [shape: f32[128,384], index: 1, kind: input, shape index: {}]
  %s2 = inlined_call_operand.vmem [shape: f32[1,384], index: 2, kind: input, shape index: {}]
  %s3 = inlined_call_operand.hbm [shape: f32[2,8,32], index: 3, kind: output, shape index: {}]
  %s4 = sld [smem:[#allocation0]]
  $region57: #{tpu_custom_call.1} parent=0
    _
  %s6 = ssub.s32 1, %s4
  %s7 = scalar_select 0, %s6, %s4
  $region1: #{tpu_custom_call.1} parent=0
    #allocation3 [shape = 'u8[8192]{0}', space=vmem, size = 0x2000, scoped, tag = 'input window, operand 0']
    #allocation4 [shape = 's32[2]{0}', space=sflag, size = 0x8, scoped, tag = 'scoped memory for tpu_custom_call.1']
    #allocation5 [shape = 's32[2]{0}', space=sflag, size = 0x8, scoped, tag = 'scoped memory for tpu_custom_call.1']
    #allocation6 [shape = 'u8[196608]{0}', space=vmem, size = 0x30000, scoped, tag = 'input window, operand 1, single buffered']
    #allocation7 [shape = 's32[1]{0}', space=sflag, size = 0x4, scoped, tag = 'scoped memory for tpu_custom_call.1']
    #allocation8 [shape = 'u8[8192]{0}', space=vmem, size = 0x2000, scoped, tag = 'output window, operand 0']
    %8 = vsyncpa [#allocation4], 0
    %s9 = scalar_lea.sflag [#allocation4], 1
    %10 = vsyncpa %s9, 0
    %11 = vsyncpa [#allocation7], 0
    %12 = vsyncpa [#allocation5], 0
    %s13 = scalar_lea.sflag [#allocation5], 1
    %14 = vsyncpa %s13, 0
    loop: start=0, step=1, limit=4
    $region2: #{tpu_custom_call.1} parent=1 // loop_pre_header
      _
    $region3: #{tpu_custom_call.1} parent=1 // loop_header
      %s16 = sphi 0, %s20
      %p17 = scmp.ge.s32.totalorder %s16, 4
      %s23 = sphi 0, %s35
      %s24 = sphi 0, %s31
      %s25 = sphi 0, %s23
      %s26 = sphi 0, %s24
      %s27 = sphi 0, %s25
      %s28 = sphi 0, %s26
      %s38 = sphi 0, %s40
      %s41 = sphi 0, %s38
      %s42 = sphi 0, %s41
      %s58 = sphi 0, %s42
      %s62 = sphi 0, %s62
      %s64 = sphi 0, %s62
      %s65 = sphi 0, %s64
      %s79 = sphi 0, %s65
      %s83 = sphi 0, %s83
      %s85 = sphi 0, %s83
      %s86 = sphi 0, %s85
      %s100 = sphi 0, %s86
      %s108 = sphi 0, %s110
      %s111 = sphi 0, %s108
      %s112 = sphi 0, %s111
      %s128 = sphi 0, %s112
    $region4: #{tpu_custom_call.1} parent=1 // loop_header_branch
      %19 = sbr.rel (%p17) target = $region8
    $region5: #{tpu_custom_call.1} parent=1 // loop_body
      %s21 = ssub.s32 %s16, 1
      %s22 = ssub.s32 %s16, 2
      %s29 = sadd.s32 1, %s24
      %p30 = scmp.ge.s32.totalorder %s29, 1
      %s31 = scalar_select %p30, 0, %s29
      %s32 = sadd.s32 1, %s23
      %s33 = scalar_select %p30, %s32, %s23
      %p34 = scmp.ge.s32.totalorder %s33, 2
      %s35 = scalar_select %p34, 0, %s33
      %s36 = ssub.s32 %s23, %s35
      %p37 = scmp.eq.s32.totalorder %s36, 0
      %s39 = sadd.s32 %s38, 1
      %s40 = scalar_select %p37, %s38, %s39
      %p43 = pneg %p37
      %p44 = scmp.eq.s32.totalorder %s16, 1
      %p45 = por %p43, %p44
      %p46 = scmp.ne.s32.totalorder %s38, %s41
      %p47 = scmp.eq.s32.totalorder %s16, 0
      %p48 = por %p46, %p47
      %p49 = scmp.ne.s32.totalorder %s38, %s41
      %p50 = scmp.eq.s32.totalorder %s21, 1
      %p51 = por %p49, %p50
      %p52 = scmp.ne.s32.totalorder %s41, %s42
      %p53 = scmp.eq.s32.totalorder %s21, 0
      %p54 = por %p52, %p53
      %p55 = scmp.ne.s32.totalorder %s41, %s42
      %p56 = scmp.eq.s32.totalorder %s22, 1
      %p57 = por %p55, %p56
      %p59 = scmp.ne.s32.totalorder %s42, %s58
      %p60 = scmp.eq.s32.totalorder %s22, 0
      %p61 = por %p59, %p60
      %s63 = sadd.s32 %s62, 1
      %p66 = scmp.eq.s32.totalorder %s16, 1
      %p67 = scmp.ne.s32.totalorder %s62, %s64
      %p68 = scmp.eq.s32.totalorder %s16, 0
      %p69 = por %p67, %p68
      %p70 = scmp.ne.s32.totalorder %s62, %s64
      %p71 = scmp.eq.s32.totalorder %s21, 1
      %p72 = por %p70, %p71
      %p73 = scmp.ne.s32.totalorder %s64, %s65
      %p74 = scmp.eq.s32.totalorder %s21, 0
      %p75 = por %p73, %p74
      %p76 = scmp.ne.s32.totalorder %s64, %s65
      %p77 = scmp.eq.s32.totalorder %s22, 1
      %p78 = por %p76, %p77
      %p80 = scmp.ne.s32.totalorder %s65, %s79
      %p81 = scmp.eq.s32.totalorder %s22, 0
      %p82 = por %p80, %p81
      %s84 = sadd.s32 %s83, 1
      %p87 = scmp.eq.s32.totalorder %s16, 1
      %p88 = scmp.ne.s32.totalorder %s83, %s85
      %p89 = scmp.eq.s32.totalorder %s16, 0
      %p90 = por %p88, %p89
      %p91 = scmp.ne.s32.totalorder %s83, %s85
      %p92 = scmp.eq.s32.totalorder %s21, 1
      %p93 = por %p91, %p92
      %p94 = scmp.ne.s32.totalorder %s85, %s86
      %p95 = scmp.eq.s32.totalorder %s21, 0
      %p96 = por %p94, %p95
      %p97 = scmp.ne.s32.totalorder %s85, %s86
      %p98 = scmp.eq.s32.totalorder %s22, 1
      %p99 = por %p97, %p98
      %p101 = scmp.ne.s32.totalorder %s86, %s100
      %p102 = scmp.eq.s32.totalorder %s22, 0
      %p103 = por %p101, %p102
      %s104 = ssub.s32 %s23, %s35
      %s105 = ssub.s32 %s24, %s31
      %s106 = sor.u32 %s104, %s105
      %p107 = scmp.eq.s32.totalorder %s106, 0
      %s109 = sadd.s32 %s108, 1
      %s110 = scalar_select %p107, %s108, %s109
      %p113 = pneg %p107
      %p114 = scmp.eq.s32.totalorder %s16, 1
      %p115 = por %p113, %p114
      %p116 = scmp.ne.s32.totalorder %s108, %s111
      %p117 = scmp.eq.s32.totalorder %s16, 0
      %p118 = por %p116, %p117
      %p119 = scmp.ne.s32.totalorder %s108, %s111
      %p120 = scmp.eq.s32.totalorder %s21, 1
      %p121 = por %p119, %p120
      %p122 = scmp.ne.s32.totalorder %s111, %s112
      %p123 = scmp.eq.s32.totalorder %s21, 0
      %p124 = por %p122, %p123
      %p125 = scmp.ne.s32.totalorder %s111, %s112
      %p126 = scmp.eq.s32.totalorder %s22, 1
      %p127 = por %p125, %p126
      %p129 = scmp.ne.s32.totalorder %s112, %s128
      %p130 = scmp.eq.s32.totalorder %s22, 0
      %p131 = por %p129, %p130
      %p132 = scmp.le.s32.totalorder 1, %s16
      %p133 = scmp.lt.s32.totalorder %s16, 3
      %p134 = pnand %p132, %p133
      %p135 = pneg %p134
      // Predicated region
      $region9: #{tpu_custom_call.1} parent=5 // pred_check
        _
      $region10: #{tpu_custom_call.1} parent=5 // pred_check_branch
        %137 = sbr.rel (%p134) target = $region12
      $region11: #{tpu_custom_call.1} parent=5 // pred_region
        %s138 = ssub.s32 %s16, 1
        // Predicated region
        $region13: #{tpu_custom_call.1} parent=11 // pred_check
          %p139 = pneg %p75
        $region14: #{tpu_custom_call.1} parent=11 // pred_check_branch
          %141 = sbr.rel (%p139) target = $region16
        $region15: #{tpu_custom_call.1} parent=11 // pred_region
          %s143 = ssub.s32 6144, 6144
          %144 = vsyncadd [#allocation7], %s143
          %s145 = sshll.u32 [#allocation6], 4
          %s146 = int_to_ptr.vmem [resolvable:$true] %s145
          %151 = dma.hbm_to_vmem [thread:$0]  %s1, 6144, %s146, [#allocation7], 384, 384, 24
        $region16: #{tpu_custom_call.1} parent=11 // pred_fallthru
          _
        // Predicated region
        $region17: #{tpu_custom_call.1} parent=11 // pred_check
          %p152 = pneg %p96
        $region18: #{tpu_custom_call.1} parent=11 // pred_check_branch
          %154 = sbr.rel (%p152) target = $region20
        $region19: #{tpu_custom_call.1} parent=11 // pred_region
          _
        $region20: #{tpu_custom_call.1} parent=11 // pred_fallthru
          _
      $region12: #{tpu_custom_call.1} parent=5 // pred_fallthru
        _
      %p155 = scmp.lt.s32.totalorder %s16, 2
      // Predicated region
      $region21: #{tpu_custom_call.1} parent=5 // pred_check
        %p156 = pneg %p155
      $region22: #{tpu_custom_call.1} parent=5 // pred_check_branch
        %158 = sbr.rel (%p156) target = $region24
      $region23: #{tpu_custom_call.1} parent=5 // pred_region
        // Predicated region
        $region25: #{tpu_custom_call.1} parent=23 // pred_check
          %p159 = pneg %p48
        $region26: #{tpu_custom_call.1} parent=23 // pred_check_branch
          %161 = sbr.rel (%p159) target = $region28
        $region27: #{tpu_custom_call.1} parent=23 // pred_region
          %s162 = sand.u32 %s38, 1
          %s163 = scalar_lea.sflag [#allocation4], %s162
          %s164 = sand.u32 %s38, 1
          %s165 = smul.addr %s164, 8
          %s166 = scalar_lea.vmem [#allocation3], %s165
          %s168 = ssub.s32 128, 128
          %169 = vsyncadd %s163, %s168
          %s170 = smul.addr %s23, 128
          %s171 = scalar_lea.hbm %s0, %s170
          %s173 = sshll.u32 %s166, 4
          %s174 = int_to_ptr.vmem [resolvable:$true] %s173
          %176 = dma.hbm_to_vmem [thread:$0]  %s171, 128, %s174, %s163
        $region28: #{tpu_custom_call.1} parent=23 // pred_fallthru
          _
      $region24: #{tpu_custom_call.1} parent=5 // pred_fallthru
        _
      %p177 = scmp.le.s32.totalorder 1, %s16
      %p178 = scmp.lt.s32.totalorder %s16, 3
      %p179 = pnand %p177, %p178
      %p180 = pneg %p179
      // Predicated region
      $region29: #{tpu_custom_call.1} parent=5 // pred_check
        _
      $region30: #{tpu_custom_call.1} parent=5 // pred_check_branch
        %182 = sbr.rel (%p179) target = $region32
      $region31: #{tpu_custom_call.1} parent=5 // pred_region
        %s183 = ssub.s32 %s16, 1
        %s184 = sand.u32 %s41, 1
        %s185 = scalar_lea.sflag [#allocation4], %s184
        %s186 = sand.u32 %s41, 1
        %s187 = smul.addr %s186, 8
        %s188 = scalar_lea.vmem [#allocation3], %s187
        // Predicated region
        $region33: #{tpu_custom_call.1} parent=31 // pred_check
          %p189 = pneg %p54
        $region34: #{tpu_custom_call.1} parent=31 // pred_check_branch
          %191 = sbr.rel (%p189) target = $region36
        $region35: #{tpu_custom_call.1} parent=31 // pred_region
          %192 = dma.done %s185, 128
        $region36: #{tpu_custom_call.1} parent=31 // pred_fallthru
          _
        // Predicated region
        $region37: #{tpu_custom_call.1} parent=31 // pred_check
          %p193 = pneg %p75
        $region38: #{tpu_custom_call.1} parent=31 // pred_check_branch
          %195 = sbr.rel (%p193) target = $region40
        $region39: #{tpu_custom_call.1} parent=31 // pred_region
          %196 = dma.done [#allocation7], 6144
        $region40: #{tpu_custom_call.1} parent=31 // pred_fallthru
          _
        %s197 = sand.u32 %s41, 1
        %s198 = scalar_lea.sflag [#allocation4], %s197
        %s199 = sand.u32 %s41, 1
        %s200 = smul.addr %s199, 8
        %s201 = scalar_lea.vmem [#allocation3], %s200
        %p202 = pneg %p54
        %p203 = pneg %p51
        %p204 = pneg %p75
        %p205 = pneg %p72
        %p206 = pneg %p96
        %p207 = pneg %p93
        %p208 = pneg %p124
        %p209 = pneg %p121
        %s210 = sand.u32 %s111, 1
        %s211 = scalar_lea.sflag [#allocation5], %s210
        %s212 = sand.u32 %s111, 1
        %s213 = smul.addr %s212, 8
        %s214 = scalar_lea.vmem [#allocation8], %s213
        %p215 = scmp.eq.s32.totalorder %s26, 0
        // Predicated region
        $region41: #{tpu_custom_call.1} parent=31 // pred_check
          %p216 = pneg %p215
        $region42: #{tpu_custom_call.1} parent=31 // pred_check_branch
          %218 = sbr.rel (%p216) target = $region44
        $region43: #{tpu_custom_call.1} parent=31 // pred_region
          %v219 = vld [vmem:[%s188] sm:$0xff]
          %v220 = vld [vmem:[#allocation6] sm:$0xff]
          %v221 = vld [vmem:[#allocation6 + $0x8] sm:$0xff]
          %v222 = vld [vmem:[#allocation6 + $0x10] sm:$0xff]
          %v223 = vld [vmem:[#allocation6 + $0x18] sm:$0xff]
          %v224 = vld [vmem:[#allocation6 + $0x20] sm:$0xff]
          %v225 = vld [vmem:[#allocation6 + $0x28] sm:$0xff]
          %v226 = vld [vmem:[#allocation6 + $0x30] sm:$0xff]
          %v227 = vld [vmem:[#allocation6 + $0x38] sm:$0xff]
          %v228 = vld [vmem:[#allocation6 + $0x40] sm:$0xff]
          %v229 = vld [vmem:[#allocation6 + $0x48] sm:$0xff]
          %v230 = vld [vmem:[#allocation6 + $0x50] sm:$0xff]
          %v231 = vld [vmem:[#allocation6 + $0x58] sm:$0xff]
          %v232 = vld [vmem:[#allocation6 + $0x60] sm:$0xff]
          %v233 = vld [vmem:[#allocation6 + $0x68] sm:$0xff]
          %v234 = vld [vmem:[#allocation6 + $0x70] sm:$0xff]
          %v235 = vld [vmem:[#allocation6 + $0x78] sm:$0xff]
          %v236 = vld [vmem:[#allocation6 + $0x80] sm:$0xff]
          %v237 = vld [vmem:[#allocation6 + $0x88] sm:$0xff]
          %v238 = vld [vmem:[#allocation6 + $0x90] sm:$0xff]
          %v239 = vld [vmem:[#allocation6 + $0x98] sm:$0xff]
          %v240 = vld [vmem:[#allocation6 + $0xa0] sm:$0xff]
          %v241 = vld [vmem:[#allocation6 + $0xa8] sm:$0xff]
          %v242 = vld [vmem:[#allocation6 + $0xb0] sm:$0xff]
          %v243 = vld [vmem:[#allocation6 + $0xb8] sm:$0xff]
          %v244 = vld [vmem:[#allocation6 + $0xc0] sm:$0xff]
          %v245 = vld [vmem:[#allocation6 + $0xc8] sm:$0xff]
          %v246 = vld [vmem:[#allocation6 + $0xd0] sm:$0xff]
          %v247 = vld [vmem:[#allocation6 + $0xd8] sm:$0xff]
          %v248 = vld [vmem:[#allocation6 + $0xe0] sm:$0xff]
          %v249 = vld [vmem:[#allocation6 + $0xe8] sm:$0xff]
          %v250 = vld [vmem:[#allocation6 + $0xf0] sm:$0xff]
          %v251 = vld [vmem:[#allocation6 + $0xf8] sm:$0xff]
          %v252 = vld [vmem:[#allocation6 + $0x100] sm:$0xff]
          %v253 = vld [vmem:[#allocation6 + $0x108] sm:$0xff]
          %v254 = vld [vmem:[#allocation6 + $0x110] sm:$0xff]
          %v255 = vld [vmem:[#allocation6 + $0x118] sm:$0xff]
          %v256 = vld [vmem:[#allocation6 + $0x120] sm:$0xff]
          %v257 = vld [vmem:[#allocation6 + $0x128] sm:$0xff]
          %v258 = vld [vmem:[#allocation6 + $0x130] sm:$0xff]
          %v259 = vld [vmem:[#allocation6 + $0x138] sm:$0xff]
          %v260 = vld [vmem:[#allocation6 + $0x140] sm:$0xff]
          %v261 = vld [vmem:[#allocation6 + $0x148] sm:$0xff]
          %v262 = vld [vmem:[#allocation6 + $0x150] sm:$0xff]
          %v263 = vld [vmem:[#allocation6 + $0x158] sm:$0xff]
          %v264 = vld [vmem:[#allocation6 + $0x160] sm:$0xff]
          %v265 = vld [vmem:[#allocation6 + $0x168] sm:$0xff]
          %v266 = vld [vmem:[#allocation6 + $0x170] sm:$0xff]
          %v267 = vld [vmem:[#allocation6 + $0x178] sm:$0xff]
          %v268 = vld [vmem:[%s2] sm:$0x7]
          %v270 = vlaneseq
          %v271 = vshrl.u32 %v270, 7
          %v272 = vsub.s32 0, %v271
          %v273 = vrot.slane %v268, %v272
          %v274 = vlaneseq
          %v275 = vshrl.u32 %v274, 7
          %v276 = vsub.s32 1, %v275
          %v277 = vrot.slane %v268, %v276
          %v278 = vlaneseq
          %v279 = vshrl.u32 %v278, 7
          %v280 = vsub.s32 2, %v279
          %v281 = vrot.slane %v268, %v280
          %285 = vmatprep.subr.mxu0 %v266
          %286 = vmatpush1.msra.mxu0 %v265
          %287 = vmatprep.subr.mxu0 %v263
          %288 = vmatpush1.msra.mxu0 %v262
          %289 = vmatprep.subr.mxu0 %v260
          %290 = vmatpush1.msra.mxu0 %v259
          %291 = vmatprep.subr.mxu0 %v257
          %292 = vmatpush1.msra.mxu0 %v256
          %293 = vmatprep.subr.mxu0 %v254
          %294 = vmatpush1.msra.mxu0 %v253
          %295 = vmatprep.subr.mxu0 %v251
          %296 = vmatpush1.msra.mxu0 %v250
          %297 = vmatprep.subr.mxu0 %v248
          %298 = vmatpush1.msra.mxu0 %v247
          %299 = vmatprep.subr.mxu0 %v245
          %300 = vmatpush1.msra.mxu0 %v244
          %301 = vmatprep.subr.mxu0 %v242
          %302 = vmatpush1.msra.mxu0 %v241
          %303 = vmatprep.subr.mxu0 %v239
          %304 = vmatpush1.msra.mxu0 %v238
          %305 = vmatprep.subr.mxu0 %v236
          %306 = vmatpush1.msra.mxu0 %v235
          %307 = vmatprep.subr.mxu0 %v233
          %308 = vmatpush1.msra.mxu0 %v232
          %309 = vmatprep.subr.mxu0 %v230
          %310 = vmatpush1.msra.mxu0 %v229
          %311 = vmatprep.subr.mxu0 %v227
          %312 = vmatpush1.msra.mxu0 %v226
          %313 = vmatprep.subr.mxu0 %v224
          %314 = vmatpush1.msra.mxu0 %v223
          %315 = vmatprep.subr.mxu0 %v221
          %316 = vmatpush1.msra.mxu0 %v220
          %317 = vmatprep.subr.mxu0 0.0
          %318 = vmatpush2.msra.mxu0 0.0
          %319 = vmatprep.subr.mxu0 0.0
          %320 = vmatpush2.msra.mxu0 0.0
          %321 = vmatprep.subr.mxu0 0.0
          %322 = vmatpush2.msra.mxu0 0.0
          %323 = vmatprep.subr.mxu0 0.0
          %324 = vmatpush2.msra.mxu0 0.0
          %325 = vmatprep.subr.mxu0 0.0
          %326 = vmatpush2.msra.mxu0 0.0
          %327 = vmatprep.subr.mxu0 0.0
          %328 = vmatpush2.msra.mxu0 0.0
          %329 = vmatprep.subr.mxu0 0.0
          %330 = vmatpush2.msra.mxu0 0.0
          %331 = vmatprep.subr.mxu0 0.0
          %332 = vmatpush2.msra.mxu0 0.0
          %333 = vmatprep.subr.mxu0 0.0
          %334 = vmatpush2.msra.mxu0 0.0
          %335 = vmatprep.subr.mxu0 0.0
          %336 = vmatpush2.msra.mxu0 0.0
          %337 = vmatprep.subr.mxu0 0.0
          %338 = vmatpush2.msra.mxu0 0.0
          %339 = vmatprep.subr.mxu0 0.0
          %340 = vmatpush2.msra.mxu0 0.0
          %341 = vmatprep.subr.mxu0 0.0
          %342 = vmatpush2.msra.mxu0 0.0
          %343 = vmatprep.subr.mxu0 0.0
          %344 = vmatpush2.msra.mxu0 0.0
          %345 = vmatprep.subr.mxu0 0.0
          %346 = vmatpush2.msra.mxu0 0.0
          %347 = vmatprep.subr.mxu0 0.0
          %348 = vmatpush2.msra.mxu0 0.0
          %349 = vmatprep.mubr.f32.mxu0 0.0
          %350 = vmatmul.mubr.f32.gmra.mxu0 %v219
          %v351 = vpop.f32.mrf.mxu0
          %v352 = vadd.f32 %v273, %v351
          %v353 = vpop.f32.mrf.mxu0
          %v354 = vadd.f32 %v277, %v353
          %355 = vdwg.mxu0
          %356 = vmatprep.subr.mxu0 0.0
          %357 = vmatpush1.msra.mxu0 %v267
          %358 = vmatprep.subr.mxu0 0.0
          %359 = vmatpush1.msra.mxu0 %v264
          %360 = vmatprep.subr.mxu0 0.0
          %361 = vmatpush1.msra.mxu0 %v261
          %362 = vmatprep.subr.mxu0 0.0
          %363 = vmatpush1.msra.mxu0 %v258
          %364 = vmatprep.subr.mxu0 0.0
          %365 = vmatpush1.msra.mxu0 %v255
          %366 = vmatprep.subr.mxu0 0.0
          %367 = vmatpush1.msra.mxu0 %v252
          %368 = vmatprep.subr.mxu0 0.0
          %369 = vmatpush1.msra.mxu0 %v249
          %370 = vmatprep.subr.mxu0 0.0
          %371 = vmatpush1.msra.mxu0 %v246
          %372 = vmatprep.subr.mxu0 0.0
          %373 = vmatpush1.msra.mxu0 %v243
          %374 = vmatprep.subr.mxu0 0.0
          %375 = vmatpush1.msra.mxu0 %v240
          %376 = vmatprep.subr.mxu0 0.0
          %377 = vmatpush1.msra.mxu0 %v237
          %378 = vmatprep.subr.mxu0 0.0
          %379 = vmatpush1.msra.mxu0 %v234
          %380 = vmatprep.subr.mxu0 0.0
          %381 = vmatpush1.msra.mxu0 %v231
          %382 = vmatprep.subr.mxu0 0.0
          %383 = vmatpush1.msra.mxu0 %v228
          %384 = vmatprep.subr.mxu0 0.0
          %385 = vmatpush1.msra.mxu0 %v225
          %386 = vmatprep.subr.mxu0 0.0
          %387 = vmatpush1.msra.mxu0 %v222
          %388 = vmatprep.subr.mxu0 0.0
          %389 = vmatpush2.msra.mxu0 0.0
          %390 = vmatprep.subr.mxu0 0.0
          %391 = vmatpush2.msra.mxu0 0.0
          %392 = vmatprep.subr.mxu0 0.0
          %393 = vmatpush2.msra.mxu0 0.0
          %394 = vmatprep.subr.mxu0 0.0
          %395 = vmatpush2.msra.mxu0 0.0
          %396 = vmatprep.subr.mxu0 0.0
          %397 = vmatpush2.msra.mxu0 0.0
          %398 = vmatprep.subr.mxu0 0.0
          %399 = vmatpush2.msra.mxu0 0.0
          %400 = vmatprep.subr.mxu0 0.0
          %401 = vmatpush2.msra.mxu0 0.0
          %402 = vmatprep.subr.mxu0 0.0
          %403 = vmatpush2.msra.mxu0 0.0
          %404 = vmatprep.subr.mxu0 0.0
          %405 = vmatpush2.msra.mxu0 0.0
          %406 = vmatprep.subr.mxu0 0.0
          %407 = vmatpush2.msra.mxu0 0.0
          %408 = vmatprep.subr.mxu0 0.0
          %409 = vmatpush2.msra.mxu0 0.0
          %410 = vmatprep.subr.mxu0 0.0
          %411 = vmatpush2.msra.mxu0 0.0
          %412 = vmatprep.subr.mxu0 0.0
          %413 = vmatpush2.msra.mxu0 0.0
          %414 = vmatprep.subr.mxu0 0.0
          %415 = vmatpush2.msra.mxu0 0.0
          %416 = vmatprep.subr.mxu0 0.0
          %417 = vmatpush2.msra.mxu0 0.0
          %418 = vmatprep.subr.mxu0 0.0
          %419 = vmatpush2.msra.mxu0 0.0
          %420 = vmatprep.mubr.f32.mxu0 0.0
          %421 = vmatmul.mubr.f32.gmra.mxu0 %v219
          %v422 = vpop.f32.mrf.mxu0
          %v423 = vadd.f32 %v281, %v422
          %v424 = vpop.f32.mrf.mxu0
          %425 = vdwg.mxu0
          %426 = vst [vmem:[#allocation2] sm:$0xff] %v352
          %427 = vst [vmem:[#allocation2 + $0x8] sm:$0xff] %v354
          %428 = vst [vmem:[#allocation2 + $0x10] sm:$0xff] %v423
        $region44: #{tpu_custom_call.1} parent=31 // pred_fallthru
          _
        %s429 = smul.u32 %s26, 8
        %s430 = sshra.s32 %s429, 3
        %s431 = sand.u32 %s429, 7
        %s432 = smul.u32 %s430, 3
        %s433 = smul.addr %s432, 8
        %s434 = scalar_lea.vmem [#allocation2], %s433
        %v435 = vld [vmem:[%s434] sm:$0xff]
        %v436 = vld [vmem:[#allocation2 + $0x8] sm:$0xff]
        %v437 = vld [vmem:[#allocation2 + $0x10] sm:$0xff]
        %438 = vmatprep.subr.mxu0 0.0
        %439 = vmatpush1.xpose.msra.mxu0 0.0
        %440 = vmatprep.subr.mxu0 0.0
        %441 = vmatpush1.xpose.msra.mxu0 0.0
        %442 = vmatprep.subr.mxu0 0.0
        %443 = vmatpush1.xpose.msra.mxu0 0.0
        %444 = vmatprep.subr.mxu0 0.0
        %445 = vmatpush1.xpose.msra.mxu0 0.0
        %446 = vmatprep.subr.mxu0 0.0
        %447 = vmatpush1.xpose.msra.mxu0 0.0
        %448 = vmatprep.subr.mxu0 0.0
        %449 = vmatpush1.xpose.msra.mxu0 0.0
        %450 = vmatprep.subr.mxu0 0.0
        %451 = vmatpush1.xpose.msra.mxu0 0.0
        %452 = vmatprep.subr.mxu0 0.0
        %453 = vmatpush1.xpose.msra.mxu0 0.0
        %454 = vmatprep.subr.mxu0 0.0
        %455 = vmatpush1.xpose.msra.mxu0 0.0
        %456 = vmatprep.subr.mxu0 0.0
        %457 = vmatpush1.xpose.msra.mxu0 0.0
        %458 = vmatprep.subr.mxu0 0.0
        %459 = vmatpush1.xpose.msra.mxu0 0.0
        %460 = vmatprep.subr.mxu0 0.0
        %461 = vmatpush1.xpose.msra.mxu0 0.0
        %462 = vmatprep.subr.mxu0 0.0
        %463 = vmatpush1.xpose.msra.mxu0 0.0
        %464 = vmatprep.subr.mxu0 0.0
        %465 = vmatpush1.xpose.msra.mxu0 0.0
        %466 = vmatprep.subr.mxu0 0.0
        %467 = vmatpush1.xpose.msra.mxu0 0.0
        %468 = vmatprep.subr.mxu0 0.0
        %469 = vmatpush1.xpose.msra.mxu0 %v436
        %470 = vmatprep.subr.mxu0 0.0
        %471 = vmatpush2.xpose.msra.mxu0 0.0
        %472 = vmatprep.subr.mxu0 0.0
        %473 = vmatpush2.xpose.msra.mxu0 0.0
        %474 = vmatprep.subr.mxu0 0.0
        %475 = vmatpush2.xpose.msra.mxu0 0.0
        %476 = vmatprep.subr.mxu0 0.0
        %477 = vmatpush2.xpose.msra.mxu0 0.0
        %478 = vmatprep.subr.mxu0 0.0
        %479 = vmatpush2.xpose.msra.mxu0 0.0
        %480 = vmatprep.subr.mxu0 0.0
        %481 = vmatpush2.xpose.msra.mxu0 0.0
        %482 = vmatprep.subr.mxu0 0.0
        %483 = vmatpush2.xpose.msra.mxu0 0.0
        %484 = vmatprep.subr.mxu0 0.0
        %485 = vmatpush2.xpose.msra.mxu0 0.0
        %486 = vmatprep.subr.mxu0 0.0
        %487 = vmatpush2.xpose.msra.mxu0 0.0
        %488 = vmatprep.subr.mxu0 0.0
        %489 = vmatpush2.xpose.msra.mxu0 0.0
        %490 = vmatprep.subr.mxu0 0.0
        %491 = vmatpush2.xpose.msra.mxu0 0.0
        %492 = vmatprep.subr.mxu0 0.0
        %493 = vmatpush2.xpose.msra.mxu0 0.0
        %494 = vmatprep.subr.mxu0 0.0
        %495 = vmatpush2.xpose.msra.mxu0 0.0
        %496 = vmatprep.subr.mxu0 0.0
        %497 = vmatpush2.xpose.msra.mxu0 0.0
        %498 = vmatprep.subr.mxu0 0.0
        %499 = vmatpush2.xpose.msra.mxu0 0.0
        %500 = vmatprep.subr.mxu0 0.0
        %501 = vmatpush2.xpose.msra.mxu0 0.0
        %502 = vmatprep.mubr.f32.mxu0 0.0
        %503 = vmatmul.mubr.f32.gmra.mxu0 %v435
        %v504 = vpop.f32.mrf.mxu0
        %v505 = vadd.f32 0.0, %v504
        %v506 = vpop.f32.mrf.mxu0
        %507 = vdwg.mxu0
        %vm508 = vcmask 64512
        %v509 = vsel %vm508, %v505, -inf
        %510 = vmax.xlane.f32.xlu0 %v509
        %v511 = vpop.xlane.xlu0 %510
        %v512 = vsub.f32 %v505, %v511
        %v513 = vmul.f32 %v512, 1.442695
        %v514 = vpow.pop %v513
        %v515 = vsel %vm508, %v514, 0.0
        %516 = vadd.xlane.f32.xlu0 %v515
        %v517 = vpop.xlane.xlu0 %516
        %v518 = vrcp.pop %v517
        %v519 = vmul.f32 %v514, %v518
        %v521 = vsel %vm508, %v519, 0
        %523 = vmatprep.subr.mxu0 0.0
        %524 = vmatpush1.msra.mxu0 0.0
        %525 = vmatprep.subr.mxu0 0.0
        %526 = vmatpush1.msra.mxu0 0.0
        %527 = vmatprep.subr.mxu0 0.0
        %528 = vmatpush1.msra.mxu0 0.0
        %529 = vmatprep.subr.mxu0 0.0
        %530 = vmatpush1.msra.mxu0 0.0
        %531 = vmatprep.subr.mxu0 0.0
        %532 = vmatpush1.msra.mxu0 0.0
        %533 = vmatprep.subr.mxu0 0.0
        %534 = vmatpush1.msra.mxu0 0.0
        %535 = vmatprep.subr.mxu0 0.0
        %536 = vmatpush1.msra.mxu0 0.0
        %537 = vmatprep.subr.mxu0 0.0
        %538 = vmatpush1.msra.mxu0 0.0
        %539 = vmatprep.subr.mxu0 0.0
        %540 = vmatpush1.msra.mxu0 0.0
        %541 = vmatprep.subr.mxu0 0.0
        %542 = vmatpush1.msra.mxu0 0.0
        %543 = vmatprep.subr.mxu0 0.0
        %544 = vmatpush1.msra.mxu0 0.0
        %545 = vmatprep.subr.mxu0 0.0
        %546 = vmatpush1.msra.mxu0 0.0
        %547 = vmatprep.subr.mxu0 0.0
        %548 = vmatpush1.msra.mxu0 0.0
        %549 = vmatprep.subr.mxu0 0.0
        %550 = vmatpush1.msra.mxu0 0.0
        %551 = vmatprep.subr.mxu0 0.0
        %552 = vmatpush1.msra.mxu0 0.0
        %553 = vmatprep.subr.mxu0 0.0
        %554 = vmatpush1.msra.mxu0 %v437
        %555 = vmatprep.subr.mxu0 0.0
        %556 = vmatpush2.msra.mxu0 0.0
        %557 = vmatprep.subr.mxu0 0.0
        %558 = vmatpush2.msra.mxu0 0.0
        %559 = vmatprep.subr.mxu0 0.0
        %560 = vmatpush2.msra.mxu0 0.0
        %561 = vmatprep.subr.mxu0 0.0
        %562 = vmatpush2.msra.mxu0 0.0
        %563 = vmatprep.subr.mxu0 0.0
        %564 = vmatpush2.msra.mxu0 0.0
        %565 = vmatprep.subr.mxu0 0.0
        %566 = vmatpush2.msra.mxu0 0.0
        %567 = vmatprep.subr.mxu0 0.0
        %568 = vmatpush2.msra.mxu0 0.0
        %569 = vmatprep.subr.mxu0 0.0
        %570 = vmatpush2.msra.mxu0 0.0
        %571 = vmatprep.subr.mxu0 0.0
        %572 = vmatpush2.msra.mxu0 0.0
        %573 = vmatprep.subr.mxu0 0.0
        %574 = vmatpush2.msra.mxu0 0.0
        %575 = vmatprep.subr.mxu0 0.0
        %576 = vmatpush2.msra.mxu0 0.0
        %577 = vmatprep.subr.mxu0 0.0
        %578 = vmatpush2.msra.mxu0 0.0
        %579 = vmatprep.subr.mxu0 0.0
        %580 = vmatpush2.msra.mxu0 0.0
        %581 = vmatprep.subr.mxu0 0.0
        %582 = vmatpush2.msra.mxu0 0.0
        %583 = vmatprep.subr.mxu0 0.0
        %584 = vmatpush2.msra.mxu0 0.0
        %585 = vmatprep.subr.mxu0 0.0
        %586 = vmatpush2.msra.mxu0 0.0
        %587 = vmatprep.mubr.f32.mxu0 0.0
        %588 = vmatmul.mubr.f32.gmra.mxu0 %v521
        %v589 = vpop.f32.mrf.mxu0
        %v590 = vadd.f32 0.0, %v589
        %v591 = vpop.f32.mrf.mxu0
        %592 = vdwg.mxu0
        %vm593 = vcmask 261120
        %594 = vst.msk [vmem:[%s214] sm:$0xff] %vm593, %v590
        %s595 = sand.u32 %s111, 1
        %s596 = scalar_lea.sflag [#allocation5], %s595
        %s597 = sand.u32 %s111, 1
        %s598 = smul.addr %s597, 8
        %s599 = scalar_lea.vmem [#allocation8], %s598
        // Predicated region
        $region45: #{tpu_custom_call.1} parent=31 // pred_check
          %p600 = pneg %p121
        $region46: #{tpu_custom_call.1} parent=31 // pred_check_branch
          %602 = sbr.rel (%p600) target = $region48
        $region47: #{tpu_custom_call.1} parent=31 // pred_region
          %s604 = ssub.s32 128, 128
          %605 = vsyncadd %s596, %s604
          %s606 = sadd.s32 %s26, %s25
          %s607 = smul.addr %s606, 128
          %s608 = scalar_lea.hbm %s3, %s607
          %s610 = sshll.u32 %s599, 4
          %s611 = int_to_ptr.vmem [resolvable:$true] %s610
          %613 = dma.vmem_to_hbm [thread:$0]  %s611, 128, %s608, %s596
        $region48: #{tpu_custom_call.1} parent=31 // pred_fallthru
          _
      $region32: #{tpu_custom_call.1} parent=5 // pred_fallthru
        _
      %p614 = scmp.le.s32.totalorder 2, %s16
      // Predicated region
      $region49: #{tpu_custom_call.1} parent=5 // pred_check
        %p615 = pneg %p614
      $region50: #{tpu_custom_call.1} parent=5 // pred_check_branch
        %617 = sbr.rel (%p615) target = $region52
      $region51: #{tpu_custom_call.1} parent=5 // pred_region
        %s618 = ssub.s32 %s16, 2
        // Predicated region
        $region53: #{tpu_custom_call.1} parent=51 // pred_check
          %p619 = pneg %p127
        $region54: #{tpu_custom_call.1} parent=51 // pred_check_branch
          %621 = sbr.rel (%p619) target = $region56
        $region55: #{tpu_custom_call.1} parent=51 // pred_region
          %s622 = sand.u32 %s112, 1
          %s623 = scalar_lea.sflag [#allocation5], %s622
          %s624 = sand.u32 %s112, 1
          %s625 = smul.addr %s624, 8
          %s626 = scalar_lea.vmem [#allocation8], %s625
          %627 = dma.done %s623, 128
        $region56: #{tpu_custom_call.1} parent=51 // pred_fallthru
          _
      $region52: #{tpu_custom_call.1} parent=5 // pred_fallthru
        _
    $region6: #{tpu_custom_call.1} parent=1 // loop_footer
      %s20 = sadd.s32 1, %s16
    $region7: #{tpu_custom_call.1} parent=1 // loop_footer_branch
      %15 = sbr.rel target = $region3
    $region8: #{tpu_custom_call.1} parent=1 // loop_exit
      _
    %628 = vsyncpa [#allocation4], 1
    %s629 = scalar_lea.sflag [#allocation4], 1
    %630 = vsyncpa %s629, 1
    %631 = vsyncpa [#allocation7], 1
    %632 = vsyncpa [#allocation5], 1
    %s633 = scalar_lea.sflag [#allocation5], 1
    %634 = vsyncpa %s633, 1

// kernel: tpu_custom_call.1
$region0: #{tpu_custom_call.1}
  #allocation0 [shape = 'u32[]', space=smem, size = 0x4, offset = 0x4, fixed_abs, tag = 'smem constant byte address 0x4 - core index']
  #allocation1 [shape = 'u32[144,128]{1,0:T(1,128)}', space=vmem, size = 0x12000, scoped, tag = 'internal scratch']
  #allocation2 [shape = 'f32[1,8,384]{2,1,0:T(8,128)}', space=vmem, size = 0x3000, scoped, tag = 'scratch operand']
  %s0 = inlined_call_operand.hbm [shape: f32[2,8,128], index: 0, kind: input, shape index: {}]
  %s1 = inlined_call_operand.hbm [shape: f32[128,384], index: 1, kind: input, shape index: {}]
  %s2 = inlined_call_operand.vmem [shape: f32[1,384], index: 2, kind: input, shape index: {}]
  %s3 = inlined_call_operand.hbm [shape: f32[2,8,32], index: 3, kind: output, shape index: {}]
  %s4 = sld [smem:[#allocation0]]
  $region57: #{tpu_custom_call.1} parent=0
    _
  %s6 = ssub.s32 1, %s4
  %s7 = scalar_select 0, %s6, %s4
  $region1: #{tpu_custom_call.1} parent=0
    #allocation3 [shape = 'u8[8192]{0}', space=vmem, size = 0x2000, scoped, tag = 'input window, operand 0']
    #allocation4 [shape = 's32[2]{0}', space=sflag, size = 0x8, scoped, tag = 'scoped memory for tpu_custom_call.1']
    #allocation5 [shape = 's32[2]{0}', space=sflag, size = 0x8, scoped, tag = 'scoped memory for tpu_custom_call.1']
    #allocation6 [shape = 'u8[196608]{0}', space=vmem, size = 0x30000, scoped, tag = 'input window, operand 1, single buffered']
    #allocation7 [shape = 's32[1]{0}', space=sflag, size = 0x4, scoped, tag = 'scoped memory for tpu_custom_call.1']
    #allocation8 [shape = 'u8[8192]{0}', space=vmem, size = 0x2000, scoped, tag = 'output window, operand 0']
    %8 = vsyncpa [#allocation4], 0
    %s9 = scalar_lea.sflag [#allocation4], 1
    %10 = vsyncpa %s9, 0
    %11 = vsyncpa [#allocation7], 0
    %12 = vsyncpa [#allocation5], 0
    %s13 = scalar_lea.sflag [#allocation5], 1
    %14 = vsyncpa %s13, 0
    loop: start=0, step=1, limit=4
    $region2: #{tpu_custom_call.1} parent=1 // loop_pre_header
      _
    $region3: #{tpu_custom_call.1} parent=1 // loop_header
      %s16 = sphi 0, %s20
      %p17 = scmp.ge.s32.totalorder %s16, 4
      %s23 = sphi 0, %s35
      %s24 = sphi 0, %s31
      %s25 = sphi 0, %s23
      %s26 = sphi 0, %s24
      %s27 = sphi 0, %s25
      %s28 = sphi 0, %s26
      %s38 = sphi 0, %s40
      %s41 = sphi 0, %s38
      %s42 = sphi 0, %s41
      %s58 = sphi 0, %s42
      %s62 = sphi 0, %s62
      %s64 = sphi 0, %s62
      %s65 = sphi 0, %s64
      %s79 = sphi 0, %s65
      %s83 = sphi 0, %s83
      %s85 = sphi 0, %s83
      %s86 = sphi 0, %s85
      %s100 = sphi 0, %s86
      %s108 = sphi 0, %s110
      %s111 = sphi 0, %s108
      %s112 = sphi 0, %s111
      %s128 = sphi 0, %s112
    $region4: #{tpu_custom_call.1} parent=1 // loop_header_branch
      %19 = sbr.rel (%p17) target = $region8
    $region5: #{tpu_custom_call.1} parent=1 // loop_body
      %s21 = ssub.s32 %s16, 1
      %s22 = ssub.s32 %s16, 2
      %s29 = sadd.s32 1, %s24
      %p30 = scmp.ge.s32.totalorder %s29, 1
      %s31 = scalar_select %p30, 0, %s29
      %s32 = sadd.s32 1, %s23
      %s33 = scalar_select %p30, %s32, %s23
      %p34 = scmp.ge.s32.totalorder %s33, 2
      %s35 = scalar_select %p34, 0, %s33
      %s36 = ssub.s32 %s23, %s35
      %p37 = scmp.eq.s32.totalorder %s36, 0
      %s39 = sadd.s32 %s38, 1
      %s40 = scalar_select %p37, %s38, %s39
      %p43 = pneg %p37
      %p44 = scmp.eq.s32.totalorder %s16, 1
      %p45 = por %p43, %p44
      %p46 = scmp.ne.s32.totalorder %s38, %s41
      %p47 = scmp.eq.s32.totalorder %s16, 0
      %p48 = por %p46, %p47
      %p49 = scmp.ne.s32.totalorder %s38, %s41
      %p50 = scmp.eq.s32.totalorder %s21, 1
      %p51 = por %p49, %p50
      %p52 = scmp.ne.s32.totalorder %s41, %s42
      %p53 = scmp.eq.s32.totalorder %s21, 0
      %p54 = por %p52, %p53
      %p55 = scmp.ne.s32.totalorder %s41, %s42
      %p56 = scmp.eq.s32.totalorder %s22, 1
      %p57 = por %p55, %p56
      %p59 = scmp.ne.s32.totalorder %s42, %s58
      %p60 = scmp.eq.s32.totalorder %s22, 0
      %p61 = por %p59, %p60
      %s63 = sadd.s32 %s62, 1
      %p66 = scmp.eq.s32.totalorder %s16, 1
      %p67 = scmp.ne.s32.totalorder %s62, %s64
      %p68 = scmp.eq.s32.totalorder %s16, 0
      %p69 = por %p67, %p68
      %p70 = scmp.ne.s32.totalorder %s62, %s64
      %p71 = scmp.eq.s32.totalorder %s21, 1
      %p72 = por %p70, %p71
      %p73 = scmp.ne.s32.totalorder %s64, %s65
      %p74 = scmp.eq.s32.totalorder %s21, 0
      %p75 = por %p73, %p74
      %p76 = scmp.ne.s32.totalorder %s64, %s65
      %p77 = scmp.eq.s32.totalorder %s22, 1
      %p78 = por %p76, %p77
      %p80 = scmp.ne.s32.totalorder %s65, %s79
      %p81 = scmp.eq.s32.totalorder %s22, 0
      %p82 = por %p80, %p81
      %s84 = sadd.s32 %s83, 1
      %p87 = scmp.eq.s32.totalorder %s16, 1
      %p88 = scmp.ne.s32.totalorder %s83, %s85
      %p89 = scmp.eq.s32.totalorder %s16, 0
      %p90 = por %p88, %p89
      %p91 = scmp.ne.s32.totalorder %s83, %s85
      %p92 = scmp.eq.s32.totalorder %s21, 1
      %p93 = por %p91, %p92
      %p94 = scmp.ne.s32.totalorder %s85, %s86
      %p95 = scmp.eq.s32.totalorder %s21, 0
      %p96 = por %p94, %p95
      %p97 = scmp.ne.s32.totalorder %s85, %s86
      %p98 = scmp.eq.s32.totalorder %s22, 1
      %p99 = por %p97, %p98
      %p101 = scmp.ne.s32.totalorder %s86, %s100
      %p102 = scmp.eq.s32.totalorder %s22, 0
      %p103 = por %p101, %p102
      %s104 = ssub.s32 %s23, %s35
      %s105 = ssub.s32 %s24, %s31
      %s106 = sor.u32 %s104, %s105
      %p107 = scmp.eq.s32.totalorder %s106, 0
      %s109 = sadd.s32 %s108, 1
      %s110 = scalar_select %p107, %s108, %s109
      %p113 = pneg %p107
      %p114 = scmp.eq.s32.totalorder %s16, 1
      %p115 = por %p113, %p114
      %p116 = scmp.ne.s32.totalorder %s108, %s111
      %p117 = scmp.eq.s32.totalorder %s16, 0
      %p118 = por %p116, %p117
      %p119 = scmp.ne.s32.totalorder %s108, %s111
      %p120 = scmp.eq.s32.totalorder %s21, 1
      %p121 = por %p119, %p120
      %p122 = scmp.ne.s32.totalorder %s111, %s112
      %p123 = scmp.eq.s32.totalorder %s21, 0
      %p124 = por %p122, %p123
      %p125 = scmp.ne.s32.totalorder %s111, %s112
      %p126 = scmp.eq.s32.totalorder %s22, 1
      %p127 = por %p125, %p126
      %p129 = scmp.ne.s32.totalorder %s112, %s128
      %p130 = scmp.eq.s32.totalorder %s22, 0
      %p131 = por %p129, %p130
      %p132 = scmp.le.s32.totalorder 1, %s16
      %p133 = scmp.lt.s32.totalorder %s16, 3
      %p134 = pnand %p132, %p133
      %p135 = pneg %p134
      // Predicated region
      $region9: #{tpu_custom_call.1} parent=5 // pred_check
        _
      $region10: #{tpu_custom_call.1} parent=5 // pred_check_branch
        %137 = sbr.rel (%p134) target = $region12
      $region11: #{tpu_custom_call.1} parent=5 // pred_region
        %s138 = ssub.s32 %s16, 1
        // Predicated region
        $region13: #{tpu_custom_call.1} parent=11 // pred_check
          %p139 = pneg %p75
        $region14: #{tpu_custom_call.1} parent=11 // pred_check_branch
          %141 = sbr.rel (%p139) target = $region16
        $region15: #{tpu_custom_call.1} parent=11 // pred_region
          %s143 = ssub.s32 6144, 6144
          %144 = vsyncadd [#allocation7], %s143
          %s145 = sshll.u32 [#allocation6], 4
          %s146 = int_to_ptr.vmem [resolvable:$true] %s145
          %151 = dma.hbm_to_vmem [thread:$0]  %s1, 6144, %s146, [#allocation7], 384, 384, 24
        $region16: #{tpu_custom_call.1} parent=11 // pred_fallthru
          _
        // Predicated region
        $region17: #{tpu_custom_call.1} parent=11 // pred_check
          %p152 = pneg %p96
        $region18: #{tpu_custom_call.1} parent=11 // pred_check_branch
          %154 = sbr.rel (%p152) target = $region20
        $region19: #{tpu_custom_call.1} parent=11 // pred_region
          _
        $region20: #{tpu_custom_call.1} parent=11 // pred_fallthru
          _
      $region12: #{tpu_custom_call.1} parent=5 // pred_fallthru
        _
      %p155 = scmp.lt.s32.totalorder %s16, 2
      // Predicated region
      $region21: #{tpu_custom_call.1} parent=5 // pred_check
        %p156 = pneg %p155
      $region22: #{tpu_custom_call.1} parent=5 // pred_check_branch
        %158 = sbr.rel (%p156) target = $region24
      $region23: #{tpu_custom_call.1} parent=5 // pred_region
        // Predicated region
        $region25: #{tpu_custom_call.1} parent=23 // pred_check
          %p159 = pneg %p48
        $region26: #{tpu_custom_call.1} parent=23 // pred_check_branch
          %161 = sbr.rel (%p159) target = $region28
        $region27: #{tpu_custom_call.1} parent=23 // pred_region
          %s162 = sand.u32 %s38, 1
          %s163 = scalar_lea.sflag [#allocation4], %s162
          %s164 = sand.u32 %s38, 1
          %s165 = smul.addr %s164, 8
          %s166 = scalar_lea.vmem [#allocation3], %s165
          %s168 = ssub.s32 128, 128
          %169 = vsyncadd %s163, %s168
          %s170 = smul.addr %s23, 128
          %s171 = scalar_lea.hbm %s0, %s170
          %s173 = sshll.u32 %s166, 4
          %s174 = int_to_ptr.vmem [resolvable:$true] %s173
          %176 = dma.hbm_to_vmem [thread:$0]  %s171, 128, %s174, %s163
        $region28: #{tpu_custom_call.1} parent=23 // pred_fallthru
          _
      $region24: #{tpu_custom_call.1} parent=5 // pred_fallthru
        _
      %p177 = scmp.le.s32.totalorder 1, %s16
      %p178 = scmp.lt.s32.totalorder %s16, 3
      %p179 = pnand %p177, %p178
      %p180 = pneg %p179
      // Predicated region
      $region29: #{tpu_custom_call.1} parent=5 // pred_check
        _
      $region30: #{tpu_custom_call.1} parent=5 // pred_check_branch
        %182 = sbr.rel (%p179) target = $region32
      $region31: #{tpu_custom_call.1} parent=5 // pred_region
        %s183 = ssub.s32 %s16, 1
        %s184 = sand.u32 %s41, 1
        %s185 = scalar_lea.sflag [#allocation4], %s184
        %s186 = sand.u32 %s41, 1
        %s187 = smul.addr %s186, 8
        %s188 = scalar_lea.vmem [#allocation3], %s187
        // Predicated region
        $region33: #{tpu_custom_call.1} parent=31 // pred_check
          %p189 = pneg %p54
        $region34: #{tpu_custom_call.1} parent=31 // pred_check_branch
          %191 = sbr.rel (%p189) target = $region36
        $region35: #{tpu_custom_call.1} parent=31 // pred_region
          %192 = dma.done %s185, 128
        $region36: #{tpu_custom_call.1} parent=31 // pred_fallthru
          _
        // Predicated region
        $region37: #{tpu_custom_call.1} parent=31 // pred_check
          %p193 = pneg %p75
        $region38: #{tpu_custom_call.1} parent=31 // pred_check_branch
          %195 = sbr.rel (%p193) target = $region40
        $region39: #{tpu_custom_call.1} parent=31 // pred_region
          %196 = dma.done [#allocation7], 6144
        $region40: #{tpu_custom_call.1} parent=31 // pred_fallthru
          _
        %s197 = sand.u32 %s41, 1
        %s198 = scalar_lea.sflag [#allocation4], %s197
        %s199 = sand.u32 %s41, 1
        %s200 = smul.addr %s199, 8
        %s201 = scalar_lea.vmem [#allocation3], %s200
        %p202 = pneg %p54
        %p203 = pneg %p51
        %p204 = pneg %p75
        %p205 = pneg %p72
        %p206 = pneg %p96
        %p207 = pneg %p93
        %p208 = pneg %p124
        %p209 = pneg %p121
        %s210 = sand.u32 %s111, 1
        %s211 = scalar_lea.sflag [#allocation5], %s210
        %s212 = sand.u32 %s111, 1
        %s213 = smul.addr %s212, 8
        %s214 = scalar_lea.vmem [#allocation8], %s213
        %p215 = scmp.eq.s32.totalorder %s26, 0
        // Predicated region
        $region41: #{tpu_custom_call.1} parent=31 // pred_check
          %p216 = pneg %p215
        $region42: #{tpu_custom_call.1} parent=31 // pred_check_branch
          %218 = sbr.rel (%p216) target = $region44
        $region43: #{tpu_custom_call.1} parent=31 // pred_region
          %v219 = vld [vmem:[%s188] sm:$0xff]
          %v220 = vld [vmem:[#allocation6] sm:$0xff]
          %v221 = vld [vmem:[#allocation6 + $0x8] sm:$0xff]
          %v222 = vld [vmem:[#allocation6 + $0x10] sm:$0xff]
          %v223 = vld [vmem:[#allocation6 + $0x18] sm:$0xff]
          %v224 = vld [vmem:[#allocation6 + $0x20] sm:$0xff]
          %v225 = vld [vmem:[#allocation6 + $0x28] sm:$0xff]
          %v226 = vld [vmem:[#allocation6 + $0x30] sm:$0xff]
          %v227 = vld [vmem:[#allocation6 + $0x38] sm:$0xff]
          %v228 = vld [vmem:[#allocation6 + $0x40] sm:$0xff]
          %v229 = vld [vmem:[#allocation6 + $0x48] sm:$0xff]
          %v230 = vld [vmem:[#allocation6 + $0x50] sm:$0xff]
          %v231 = vld [vmem:[#allocation6 + $0x58] sm:$0xff]
          %v232 = vld [vmem:[#allocation6 + $0x60] sm:$0xff]
          %v233 = vld [vmem:[#allocation6 + $0x68] sm:$0xff]
          %v234 = vld [vmem:[#allocation6 + $0x70] sm:$0xff]
          %v235 = vld [vmem:[#allocation6 + $0x78] sm:$0xff]
          %v236 = vld [vmem:[#allocation6 + $0x80] sm:$0xff]
          %v237 = vld [vmem:[#allocation6 + $0x88] sm:$0xff]
          %v238 = vld [vmem:[#allocation6 + $0x90] sm:$0xff]
          %v239 = vld [vmem:[#allocation6 + $0x98] sm:$0xff]
          %v240 = vld [vmem:[#allocation6 + $0xa0] sm:$0xff]
          %v241 = vld [vmem:[#allocation6 + $0xa8] sm:$0xff]
          %v242 = vld [vmem:[#allocation6 + $0xb0] sm:$0xff]
          %v243 = vld [vmem:[#allocation6 + $0xb8] sm:$0xff]
          %v244 = vld [vmem:[#allocation6 + $0xc0] sm:$0xff]
          %v245 = vld [vmem:[#allocation6 + $0xc8] sm:$0xff]
          %v246 = vld [vmem:[#allocation6 + $0xd0] sm:$0xff]
          %v247 = vld [vmem:[#allocation6 + $0xd8] sm:$0xff]
          %v248 = vld [vmem:[#allocation6 + $0xe0] sm:$0xff]
          %v249 = vld [vmem:[#allocation6 + $0xe8] sm:$0xff]
          %v250 = vld [vmem:[#allocation6 + $0xf0] sm:$0xff]
          %v251 = vld [vmem:[#allocation6 + $0xf8] sm:$0xff]
          %v252 = vld [vmem:[#allocation6 + $0x100] sm:$0xff]
          %v253 = vld [vmem:[#allocation6 + $0x108] sm:$0xff]
          %v254 = vld [vmem:[#allocation6 + $0x110] sm:$0xff]
          %v255 = vld [vmem:[#allocation6 + $0x118] sm:$0xff]
          %v256 = vld [vmem:[#allocation6 + $0x120] sm:$0xff]
          %v257 = vld [vmem:[#allocation6 + $0x128] sm:$0xff]
          %v258 = vld [vmem:[#allocation6 + $0x130] sm:$0xff]
          %v259 = vld [vmem:[#allocation6 + $0x138] sm:$0xff]
          %v260 = vld [vmem:[#allocation6 + $0x140] sm:$0xff]
          %v261 = vld [vmem:[#allocation6 + $0x148] sm:$0xff]
          %v262 = vld [vmem:[#allocation6 + $0x150] sm:$0xff]
          %v263 = vld [vmem:[#allocation6 + $0x158] sm:$0xff]
          %v264 = vld [vmem:[#allocation6 + $0x160] sm:$0xff]
          %v265 = vld [vmem:[#allocation6 + $0x168] sm:$0xff]
          %v266 = vld [vmem:[#allocation6 + $0x170] sm:$0xff]
          %v267 = vld [vmem:[#allocation6 + $0x178] sm:$0xff]
          %v268 = vld [vmem:[%s2] sm:$0x7]
          %v270 = vlaneseq
          %v271 = vshrl.u32 %v270, 7
          %v272 = vsub.s32 0, %v271
          %v273 = vrot.slane %v268, %v272
          %v274 = vlaneseq
          %v275 = vshrl.u32 %v274, 7
          %v276 = vsub.s32 1, %v275
          %v277 = vrot.slane %v268, %v276
          %v278 = vlaneseq
          %v279 = vshrl.u32 %v278, 7
          %v280 = vsub.s32 2, %v279
          %v281 = vrot.slane %v268, %v280
          %285 = vmatprep.subr.mxu0 %v266
          %286 = vmatpush1.msra.mxu0 %v265
          %287 = vmatprep.subr.mxu0 %v263
          %288 = vmatpush1.msra.mxu0 %v262
          %289 = vmatprep.subr.mxu0 %v260
          %290 = vmatpush1.msra.mxu0 %v259
          %291 = vmatprep.subr.mxu0 %v257
          %292 = vmatpush1.msra.mxu0 %v256
          %293 = vmatprep.subr.mxu0 %v254
          %294 = vmatpush1.msra.mxu0 %v253
          %295 = vmatprep.subr.mxu0 %v251
          %296 = vmatpush1.msra.mxu0 %v250
          %297 = vmatprep.subr.mxu0 %v248
          %298 = vmatpush1.msra.mxu0 %v247
          %299 = vmatprep.subr.mxu0 %v245
          %300 = vmatpush1.msra.mxu0 %v244
          %301 = vmatprep.subr.mxu0 %v242
          %302 = vmatpush1.msra.mxu0 %v241
          %303 = vmatprep.subr.mxu0 %v239
          %304 = vmatpush1.msra.mxu0 %v238
          %305 = vmatprep.subr.mxu0 %v236
          %306 = vmatpush1.msra.mxu0 %v235
          %307 = vmatprep.subr.mxu0 %v233
          %308 = vmatpush1.msra.mxu0 %v232
          %309 = vmatprep.subr.mxu0 %v230
          %310 = vmatpush1.msra.mxu0 %v229
          %311 = vmatprep.subr.mxu0 %v227
          %312 = vmatpush1.msra.mxu0 %v226
          %313 = vmatprep.subr.mxu0 %v224
          %314 = vmatpush1.msra.mxu0 %v223
          %315 = vmatprep.subr.mxu0 %v221
          %316 = vmatpush1.msra.mxu0 %v220
          %317 = vmatprep.subr.mxu0 0.0
          %318 = vmatpush2.msra.mxu0 0.0
          %319 = vmatprep.subr.mxu0 0.0
          %320 = vmatpush2.msra.mxu0 0.0
          %321 = vmatprep.subr.mxu0 0.0
          %322 = vmatpush2.msra.mxu0 0.0
          %323 = vmatprep.subr.mxu0 0.0
          %324 = vmatpush2.msra.mxu0 0.0
          %325 = vmatprep.subr.mxu0 0.0
          %326 = vmatpush2.msra.mxu0 0.0
          %327 = vmatprep.subr.mxu0 0.0
          %328 = vmatpush2.msra.mxu0 0.0
          %329 = vmatprep.subr.mxu0 0.0
          %330 = vmatpush2.msra.mxu0 0.0
          %331 = vmatprep.subr.mxu0 0.0
          %332 = vmatpush2.msra.mxu0 0.0
          %333 = vmatprep.subr.mxu0 0.0
          %334 = vmatpush2.msra.mxu0 0.0
          %335 = vmatprep.subr.mxu0 0.0
          %336 = vmatpush2.msra.mxu0 0.0
          %337 = vmatprep.subr.mxu0 0.0
          %338 = vmatpush2.msra.mxu0 0.0
          %339 = vmatprep.subr.mxu0 0.0
          %340 = vmatpush2.msra.mxu0 0.0
          %341 = vmatprep.subr.mxu0 0.0
          %342 = vmatpush2.msra.mxu0 0.0
          %343 = vmatprep.subr.mxu0 0.0
          %344 = vmatpush2.msra.mxu0 0.0
          %345 = vmatprep.subr.mxu0 0.0
          %346 = vmatpush2.msra.mxu0 0.0
          %347 = vmatprep.subr.mxu0 0.0
          %348 = vmatpush2.msra.mxu0 0.0
          %349 = vmatprep.mubr.f32.mxu0 0.0
          %350 = vmatmul.mubr.f32.gmra.mxu0 %v219
          %v351 = vpop.f32.mrf.mxu0
          %v352 = vadd.f32 %v273, %v351
          %v353 = vpop.f32.mrf.mxu0
          %v354 = vadd.f32 %v277, %v353
          %355 = vdwg.mxu0
          %356 = vmatprep.subr.mxu0 0.0
          %357 = vmatpush1.msra.mxu0 %v267
          %358 = vmatprep.subr.mxu0 0.0
          %359 = vmatpush1.msra.mxu0 %v264
          %360 = vmatprep.subr.mxu0 0.0
          %361 = vmatpush1.msra.mxu0 %v261
          %362 = vmatprep.subr.mxu0 0.0
          %363 = vmatpush1.msra.mxu0 %v258
          %364 = vmatprep.subr.mxu0 0.0
          %365 = vmatpush1.msra.mxu0 %v255
          %366 = vmatprep.subr.mxu0 0.0
          %367 = vmatpush1.msra.mxu0 %v252
          %368 = vmatprep.subr.mxu0 0.0
          %369 = vmatpush1.msra.mxu0 %v249
          %370 = vmatprep.subr.mxu0 0.0
          %371 = vmatpush1.msra.mxu0 %v246
          %372 = vmatprep.subr.mxu0 0.0
          %373 = vmatpush1.msra.mxu0 %v243
          %374 = vmatprep.subr.mxu0 0.0
          %375 = vmatpush1.msra.mxu0 %v240
          %376 = vmatprep.subr.mxu0 0.0
          %377 = vmatpush1.msra.mxu0 %v237
          %378 = vmatprep.subr.mxu0 0.0
          %379 = vmatpush1.msra.mxu0 %v234
          %380 = vmatprep.subr.mxu0 0.0
          %381 = vmatpush1.msra.mxu0 %v231
          %382 = vmatprep.subr.mxu0 0.0
          %383 = vmatpush1.msra.mxu0 %v228
          %384 = vmatprep.subr.mxu0 0.0
          %385 = vmatpush1.msra.mxu0 %v225
          %386 = vmatprep.subr.mxu0 0.0
          %387 = vmatpush1.msra.mxu0 %v222
          %388 = vmatprep.subr.mxu0 0.0
          %389 = vmatpush2.msra.mxu0 0.0
          %390 = vmatprep.subr.mxu0 0.0
          %391 = vmatpush2.msra.mxu0 0.0
          %392 = vmatprep.subr.mxu0 0.0
          %393 = vmatpush2.msra.mxu0 0.0
          %394 = vmatprep.subr.mxu0 0.0
          %395 = vmatpush2.msra.mxu0 0.0
          %396 = vmatprep.subr.mxu0 0.0
          %397 = vmatpush2.msra.mxu0 0.0
          %398 = vmatprep.subr.mxu0 0.0
          %399 = vmatpush2.msra.mxu0 0.0
          %400 = vmatprep.subr.mxu0 0.0
          %401 = vmatpush2.msra.mxu0 0.0
          %402 = vmatprep.subr.mxu0 0.0
          %403 = vmatpush2.msra.mxu0 0.0
          %404 = vmatprep.subr.mxu0 0.0
          %405 = vmatpush2.msra.mxu0 0.0
          %406 = vmatprep.subr.mxu0 0.0
          %407 = vmatpush2.msra.mxu0 0.0
          %408 = vmatprep.subr.mxu0 0.0
          %409 = vmatpush2.msra.mxu0 0.0
          %410 = vmatprep.subr.mxu0 0.0
          %411 = vmatpush2.msra.mxu0 0.0
          %412 = vmatprep.subr.mxu0 0.0
          %413 = vmatpush2.msra.mxu0 0.0
          %414 = vmatprep.subr.mxu0 0.0
          %415 = vmatpush2.msra.mxu0 0.0
          %416 = vmatprep.subr.mxu0 0.0
          %417 = vmatpush2.msra.mxu0 0.0
          %418 = vmatprep.subr.mxu0 0.0
          %419 = vmatpush2.msra.mxu0 0.0
          %420 = vmatprep.mubr.f32.mxu0 0.0
          %421 = vmatmul.mubr.f32.gmra.mxu0 %v219
          %v422 = vpop.f32.mrf.mxu0
          %v423 = vadd.f32 %v281, %v422
          %v424 = vpop.f32.mrf.mxu0
          %425 = vdwg.mxu0
          %426 = vst [vmem:[#allocation2] sm:$0xff] %v352
          %427 = vst [vmem:[#allocation2 + $0x8] sm:$0xff] %v354
          %428 = vst [vmem:[#allocation2 + $0x10] sm:$0xff] %v423
        $region44: #{tpu_custom_call.1} parent=31 // pred_fallthru
          _
        %s429 = smul.u32 %s26, 8
        %s430 = sshra.s32 %s429, 3
        %s431 = sand.u32 %s429, 7
        %s432 = smul.u32 %s430, 3
        %s433 = smul.addr %s432, 8
        %s434 = scalar_lea.vmem [#allocation2], %s433
        %v435 = vld [vmem:[%s434] sm:$0xff]
        %v436 = vld [vmem:[#allocation2 + $0x8] sm:$0xff]
        %v437 = vld [vmem:[#allocation2 + $0x10] sm:$0xff]
        %438 = vmatprep.subr.mxu0 0.0
        %439 = vmatpush1.xpose.msra.mxu0 0.0
        %440 = vmatprep.subr.mxu0 0.0
        %441 = vmatpush1.xpose.msra.mxu0 0.0
        %442 = vmatprep.subr.mxu0 0.0
        %443 = vmatpush1.xpose.msra.mxu0 0.0
        %444 = vmatprep.subr.mxu0 0.0
        %445 = vmatpush1.xpose.msra.mxu0 0.0
        %446 = vmatprep.subr.mxu0 0.0
        %447 = vmatpush1.xpose.msra.mxu0 0.0
        %448 = vmatprep.subr.mxu0 0.0
        %449 = vmatpush1.xpose.msra.mxu0 0.0
        %450 = vmatprep.subr.mxu0 0.0
        %451 = vmatpush1.xpose.msra.mxu0 0.0
        %452 = vmatprep.subr.mxu0 0.0
        %453 = vmatpush1.xpose.msra.mxu0 0.0
        %454 = vmatprep.subr.mxu0 0.0
        %455 = vmatpush1.xpose.msra.mxu0 0.0
        %456 = vmatprep.subr.mxu0 0.0
        %457 = vmatpush1.xpose.msra.mxu0 0.0
        %458 = vmatprep.subr.mxu0 0.0
        %459 = vmatpush1.xpose.msra.mxu0 0.0
        %460 = vmatprep.subr.mxu0 0.0
        %461 = vmatpush1.xpose.msra.mxu0 0.0
        %462 = vmatprep.subr.mxu0 0.0
        %463 = vmatpush1.xpose.msra.mxu0 0.0
        %464 = vmatprep.subr.mxu0 0.0
        %465 = vmatpush1.xpose.msra.mxu0 0.0
        %466 = vmatprep.subr.mxu0 0.0
        %467 = vmatpush1.xpose.msra.mxu0 0.0
        %468 = vmatprep.subr.mxu0 0.0
        %469 = vmatpush1.xpose.msra.mxu0 %v436
        %470 = vmatprep.subr.mxu0 0.0
        %471 = vmatpush2.xpose.msra.mxu0 0.0
        %472 = vmatprep.subr.mxu0 0.0
        %473 = vmatpush2.xpose.msra.mxu0 0.0
        %474 = vmatprep.subr.mxu0 0.0
        %475 = vmatpush2.xpose.msra.mxu0 0.0
        %476 = vmatprep.subr.mxu0 0.0
        %477 = vmatpush2.xpose.msra.mxu0 0.0
        %478 = vmatprep.subr.mxu0 0.0
        %479 = vmatpush2.xpose.msra.mxu0 0.0
        %480 = vmatprep.subr.mxu0 0.0
        %481 = vmatpush2.xpose.msra.mxu0 0.0
        %482 = vmatprep.subr.mxu0 0.0
        %483 = vmatpush2.xpose.msra.mxu0 0.0
        %484 = vmatprep.subr.mxu0 0.0
        %485 = vmatpush2.xpose.msra.mxu0 0.0
        %486 = vmatprep.subr.mxu0 0.0
        %487 = vmatpush2.xpose.msra.mxu0 0.0
        %488 = vmatprep.subr.mxu0 0.0
        %489 = vmatpush2.xpose.msra.mxu0 0.0
        %490 = vmatprep.subr.mxu0 0.0
        %491 = vmatpush2.xpose.msra.mxu0 0.0
        %492 = vmatprep.subr.mxu0 0.0
        %493 = vmatpush2.xpose.msra.mxu0 0.0
        %494 = vmatprep.subr.mxu0 0.0
        %495 = vmatpush2.xpose.msra.mxu0 0.0
        %496 = vmatprep.subr.mxu0 0.0
        %497 = vmatpush2.xpose.msra.mxu0 0.0
        %498 = vmatprep.subr.mxu0 0.0
        %499 = vmatpush2.xpose.msra.mxu0 0.0
        %500 = vmatprep.subr.mxu0 0.0
        %501 = vmatpush2.xpose.msra.mxu0 0.0
        %502 = vmatprep.mubr.f32.mxu0 0.0
        %503 = vmatmul.mubr.f32.gmra.mxu0 %v435
        %v504 = vpop.f32.mrf.mxu0
        %v505 = vadd.f32 0.0, %v504
        %v506 = vpop.f32.mrf.mxu0
        %507 = vdwg.mxu0
        %vm508 = vcmask 64512
        %v509 = vsel %vm508, %v505, -inf
        %510 = vmax.xlane.f32.xlu0 %v509
        %v511 = vpop.xlane.xlu0 %510
        %v512 = vsub.f32 %v505, %v511
        %v513 = vmul.f32 %v512, 1.442695
        %v514 = vpow.pop %v513
        %v515 = vsel %vm508, %v514, 0.0
        %516 = vadd.xlane.f32.xlu0 %v515
        %v517 = vpop.xlane.xlu0 %516
        %v518 = vrcp.pop %v517
        %v519 = vmul.f32 %v514, %v518
        %v521 = vsel %vm508, %v519, 0
        %523 = vmatprep.subr.mxu0 0.0
        %524 = vmatpush1.msra.mxu0 0.0
        %525 = vmatprep.subr.mxu0 0.0
        %526 = vmatpush1.msra.mxu0 0.0
        %527 = vmatprep.subr.mxu0 0.0
        %528 = vmatpush1.msra.mxu0 0.0
        %529 = vmatprep.subr.mxu0 0.0
        %530 = vmatpush1.msra.mxu0 0.0
        %531 = vmatprep.subr.mxu0 0.0
        %532 = vmatpush1.msra.mxu0 0.0
        %533 = vmatprep.subr.mxu0 0.0
        %534 = vmatpush1.msra.mxu0 0.0
        %535 = vmatprep.subr.mxu0 0.0
        %536 = vmatpush1.msra.mxu0 0.0
        %537 = vmatprep.subr.mxu0 0.0
        %538 = vmatpush1.msra.mxu0 0.0
        %539 = vmatprep.subr.mxu0 0.0
        %540 = vmatpush1.msra.mxu0 0.0
        %541 = vmatprep.subr.mxu0 0.0
        %542 = vmatpush1.msra.mxu0 0.0
        %543 = vmatprep.subr.mxu0 0.0
        %544 = vmatpush1.msra.mxu0 0.0
        %545 = vmatprep.subr.mxu0 0.0
        %546 = vmatpush1.msra.mxu0 0.0
        %547 = vmatprep.subr.mxu0 0.0
        %548 = vmatpush1.msra.mxu0 0.0
        %549 = vmatprep.subr.mxu0 0.0
        %550 = vmatpush1.msra.mxu0 0.0
        %551 = vmatprep.subr.mxu0 0.0
        %552 = vmatpush1.msra.mxu0 0.0
        %553 = vmatprep.subr.mxu0 0.0
        %554 = vmatpush1.msra.mxu0 %v437
        %555 = vmatprep.subr.mxu0 0.0
        %556 = vmatpush2.msra.mxu0 0.0
        %557 = vmatprep.subr.mxu0 0.0
        %558 = vmatpush2.msra.mxu0 0.0
        %559 = vmatprep.subr.mxu0 0.0
        %560 = vmatpush2.msra.mxu0 0.0
        %561 = vmatprep.subr.mxu0 0.0
        %562 = vmatpush2.msra.mxu0 0.0
        %563 = vmatprep.subr.mxu0 0.0
        %564 = vmatpush2.msra.mxu0 0.0
        %565 = vmatprep.subr.mxu0 0.0
        %566 = vmatpush2.msra.mxu0 0.0
        %567 = vmatprep.subr.mxu0 0.0
        %568 = vmatpush2.msra.mxu0 0.0
        %569 = vmatprep.subr.mxu0 0.0
        %570 = vmatpush2.msra.mxu0 0.0
        %571 = vmatprep.subr.mxu0 0.0
        %572 = vmatpush2.msra.mxu0 0.0
        %573 = vmatprep.subr.mxu0 0.0
        %574 = vmatpush2.msra.mxu0 0.0
        %575 = vmatprep.subr.mxu0 0.0
        %576 = vmatpush2.msra.mxu0 0.0
        %577 = vmatprep.subr.mxu0 0.0
        %578 = vmatpush2.msra.mxu0 0.0
        %579 = vmatprep.subr.mxu0 0.0
        %580 = vmatpush2.msra.mxu0 0.0
        %581 = vmatprep.subr.mxu0 0.0
        %582 = vmatpush2.msra.mxu0 0.0
        %583 = vmatprep.subr.mxu0 0.0
        %584 = vmatpush2.msra.mxu0 0.0
        %585 = vmatprep.subr.mxu0 0.0
        %586 = vmatpush2.msra.mxu0 0.0
        %587 = vmatprep.mubr.f32.mxu0 0.0
        %588 = vmatmul.mubr.f32.gmra.mxu0 %v521
        %v589 = vpop.f32.mrf.mxu0
        %v590 = vadd.f32 0.0, %v589
        %v591 = vpop.f32.mrf.mxu0
        %592 = vdwg.mxu0
        %vm593 = vcmask 261120
        %594 = vst.msk [vmem:[%s214] sm:$0xff] %vm593, %v590
        %s595 = sand.u32 %s111, 1
        %s596 = scalar_lea.sflag [#allocation5], %s595
        %s597 = sand.u32 %s111, 1
        %s598 = smul.addr %s597, 8
        %s599 = scalar_lea.vmem [#allocation8], %s598
        // Predicated region
        $region45: #{tpu_custom_call.1} parent=31 // pred_check
          %p600 = pneg %p121
        $region46: #{tpu_custom_call.1} parent=31 // pred_check_branch
          %602 = sbr.rel (%p600) target = $region48
        $region47: #{tpu_custom_call.1} parent=31 // pred_region
          %s604 = ssub.s32 128, 128
          %605 = vsyncadd %s596, %s604
          %s606 = sadd.s32 %s26, %s25
          %s607 = smul.addr %s606, 128
          %s608 = scalar_lea.hbm %s3, %s607
          %s610 = sshll.u32 %s599, 4
          %s611 = int_to_ptr.vmem [resolvable:$true] %s610
          %613 = dma.vmem_to_hbm [thread:$0]  %s611, 128, %s608, %s596
        $region48: #{tpu_custom_call.1} parent=31 // pred_fallthru
          _
      $region32: #{tpu_custom_call.1} parent=5 // pred_fallthru
        _
      %p614 = scmp.le.s32.totalorder 2, %s16
      // Predicated region
      $region49: #{tpu_custom_call.1} parent=5 // pred_check
        %p615 = pneg %p614
      $region50: #{tpu_custom_call.1} parent=5 // pred_check_branch
        %617 = sbr.rel (%p615) target = $region52
      $region51: #{tpu_custom_call.1} parent=5 // pred_region
        %s618 = ssub.s32 %s16, 2
        // Predicated region
        $region53: #{tpu_custom_call.1} parent=51 // pred_check
          %p619 = pneg %p127
        $region54: #{tpu_custom_call.1} parent=51 // pred_check_branch
          %621 = sbr.rel (%p619) target = $region56
        $region55: #{tpu_custom_call.1} parent=51 // pred_region
          %s622 = sand.u32 %s112, 1
          %s623 = scalar_lea.sflag [#allocation5], %s622
          %s624 = sand.u32 %s112, 1
          %s625 = smul.addr %s624, 8
          %s626 = scalar_lea.vmem [#allocation8], %s625
          %627 = dma.done %s623, 128
        $region56: #{tpu_custom_call.1} parent=51 // pred_fallthru
          _
      $region52: #{tpu_custom_call.1} parent=5 // pred_fallthru
        _
    $region6: #{tpu_custom_call.1} parent=1 // loop_footer
      %s20 = sadd.s32 1, %s16
    $region7: #{tpu_custom_call.1} parent=1 // loop_footer_branch
      %15 = sbr.rel target = $region3
    $region8: #{tpu_custom_call.1} parent=1 // loop_exit
      _
    %628 = vsyncpa [#allocation4], 1
    %s629 = scalar_lea.sflag [#allocation4], 1
    %630 = vsyncpa %s629, 1
    %631 = vsyncpa [#allocation7], 1
    %632 = vsyncpa [#allocation5], 1
    %s633 = scalar_lea.sflag [#allocation5], 1
    %634 = vsyncpa %s633, 1

</llo_original>
